<compile_context>
chip_gen: v5e
topology: v5e:2x2
jax: 0.10.0
libtpu: 0.0.40
codegen_flags: <defaults>
</compile_context>

<pallas_src>
import functools
import math

import jax
import jax.numpy as jnp
from jax.experimental import pallas as pl
from jax.experimental.pallas import tpu as pltpu


def dueling_rnn_kernel(x_ref, h0_ref,
                       w1_ref, b1_ref,
                       wih_ref, bih_ref,
                       whh_ref, bhh_n_ref,
                       wh1_ref, bh1_ref, wh2_ref, bh2_ref,
                       qs_ref, state_ref,
                       *, TC, B, H, OUT):
    f32 = jnp.float32
    md = w1_ref.dtype    # matmul-input dtype for the hoisted (non-recurrent) matmuls
    rmd = whh_ref.dtype  # matmul-input dtype for the recurrent h @ Whh matmul

    # ---- init the carried GRU state on the first time chunk ----
    @pl.when(pl.program_id(0) == 0)
    def _():
        state_ref[...] = h0_ref[...]

    # ---- hoisted, time-independent matmuls over the whole chunk (B*TC rows) ----
    D = x_ref.shape[2]
    x2 = x_ref[...].reshape(B * TC, D).astype(md)            # batch-major rows: b*TC + t
    z1 = jnp.maximum(
        jnp.dot(x2, w1_ref[...], preferred_element_type=f32) + b1_ref[...], 0.0)
    # bih already contains b_ih + folded b_hr/b_hz (b_hn excluded; see below).
    gi = jnp.dot(z1.astype(md), wih_ref[...], preferred_element_type=f32) + bih_ref[...]
    gi3 = gi.reshape(B, TC, 3 * H)

    # Hoisted out of the recurrence: weight loads + single (B, H) bias broadcast.
    if 3 * H <= 128:
        whh_all, whh_parts = whh_ref[...], None
    else:
        whh_all = None
        whh_parts = (whh_ref[:, :H], whh_ref[:, H:2 * H], whh_ref[:, 2 * H:])
    bhh_n = jnp.broadcast_to(bhh_n_ref[...], (B, H))

    # ---- serial GRU recurrence: only h @ Whh is on the critical path ----
    h = state_ref[...]                                       # (B, H) f32 carry
    h_steps = []
    for t in range(TC):        # short static unroll over the chunk
        hm = h.astype(rmd)
        if whh_parts is None:  # 3H <= 128: ONE MXU push per step, lane-slice gates
            gh = jnp.dot(hm, whh_all, preferred_element_type=f32)
            gh_r, gh_z, gh_n = gh[:, :H], gh[:, H:2 * H], gh[:, 2 * H:]
        else:                  # H >= 128: per-gate matmuls (lane-aligned weights)
            gh_r = jnp.dot(hm, whh_parts[0], preferred_element_type=f32)
            gh_z = jnp.dot(hm, whh_parts[1], preferred_element_type=f32)
            gh_n = jnp.dot(hm, whh_parts[2], preferred_element_type=f32)
        gi_t = gi3[:, t, :]                                   # (B, 3H), static slice
        r = jax.nn.sigmoid(gi_t[:, :H] + gh_r)
        z = jax.nn.sigmoid(gi_t[:, H:2 * H] + gh_z)
        n = jnp.tanh(gi_t[:, 2 * H:] + r * (gh_n + bhh_n))    # b_hn stays inside r*(...)
        h = (1.0 - z) * n + z * h
        h_steps.append(h)                                     # registers, no VMEM stash
    state_ref[...] = h                                        # carry to next chunk

    # ---- dueling heads, batched over the chunk (no per-step masked stores) ----
    hs = jnp.stack(h_steps, axis=1).reshape(B * TC, H).astype(md)   # rows = b*TC + t
    hh = jnp.maximum(
        jnp.dot(hs, wh1_ref[...], preferred_element_type=f32) + bh1_ref[...], 0.0)
    ho = jnp.dot(hh.astype(md), wh2_ref[...], preferred_element_type=f32) + bh2_ref[...]
    a = ho[:, :OUT]                                           # advantage (lanes 0..OUT-1)
    v = ho[:, OUT:OUT + 1]                                    # value
    q = v + (a - jnp.mean(a, axis=-1, keepdims=True))
    qs_ref[...] = q.reshape(B, TC, OUT)                       # one store per chunk


def prepare_params(params, matmul_dtype=jnp.bfloat16, recurrent_matmul_dtype=jnp.float32):
    """One-time parameter prep (hoisted out of the forward path).

    matmul_dtype: input dtype of the hoisted matmuls (fc1, gi precompute, heads);
      bf16 is recommended on all chips (v5e's MXU is bf16-native too). Accumulation
      and all gate elementwise math stay f32.
    recurrent_matmul_dtype: input dtype of the per-step h @ Whh matmul. Kept f32 by
      default — bf16 rounding of h compounds over long sequences.
    """
    H = params["whh"].shape[0]
    OUT = params["wa2"].shape[1]
    n_hid = params["wa1"].shape[1]
    md, rmd = matmul_dtype, recurrent_matmul_dtype

    bih, bhh = params["bih"], params["bhh"]
    # Fold b_hr / b_hz into the input-side biases (purely additive with gi_r/gi_z).
    # b_hn must stay separate: PyTorch GRU computes n = tanh(gi_n + r*(gh_n + b_hn)).
    bih_folded = jnp.concatenate(
        [bih[:, :H] + bhh[:, :H], bih[:, H:2 * H] + bhh[:, H:2 * H], bih[:, 2 * H:]],
        axis=1)

    # Fused dueling heads: layer-1 = [Wa1 | Wv1]; layer-2 = block-diag -> [a | v].
    wh1 = jnp.concatenate([params["wa1"], params["wv1"]], axis=1)     # (H, 64)
    bh1 = jnp.concatenate([params["ba1"], params["bv1"]], axis=1)     # (1, 64)
    wh2 = jnp.zeros((2 * n_hid, OUT + 1), jnp.float32)
    wh2 = wh2.at[:n_hid, :OUT].set(params["wa2"])                     # advantage block
    wh2 = wh2.at[n_hid:, OUT:].set(params["wv2"])                     # value block
    bh2 = jnp.concatenate([params["ba2"], params["bv2"]], axis=1)     # (1, OUT+1)

    return {
        "w1": params["w1"].astype(md), "b1": params["b1"],
        "wih": params["wih"].astype(md), "bih": bih_folded,
        "whh": params["whh"].astype(rmd), "bhh_n": bhh[:, 2 * H:],
        "wh1": wh1.astype(md), "bh1": bh1,
        "wh2": wh2.astype(md), "bh2": bh2,
    }


def _vmem_limit_bytes(arrays, out_shapes):
    # Conservative estimate: whole arrays (not just per-chunk blocks), double
    # buffered, plus headroom for in-kernel temporaries. For production sizes,
    # cap to the chip's physical VMEM (64 MiB on v7x, 128 MiB on v5e/v6e).
    total = sum(int(a.size) * a.dtype.itemsize for a in arrays)
    total += sum(math.prod(s.shape) * jnp.dtype(s.dtype).itemsize for s in out_shapes)
    return int(max(32 << 20, min(100 << 20, 2 * total + (8 << 20))))


def dueling_rnn_forward(x_btd, h0, prepped, time_chunk=8):
    """x_btd: (B, T, D) batch-first; h0: (1, B, H). Returns (qs (B,T,OUT), state (1,B,H))."""
    B, T, D = x_btd.shape
    H = prepped["bhh_n"].shape[-1]
    OUT = prepped["wh2"].shape[-1] - 1
    TC = min(time_chunk, T)
    assert T % TC == 0, "sequence length must be divisible by the time chunk"
    # TODO(synk): for non-trivial B on v7x, add a leading 'parallel' batch-chunk grid
    # axis (dimension_semantics=('parallel','arbitrary')) to engage the second TC.

    h0_2d = h0.reshape(B, H).astype(jnp.float32)   # (1,B,H)->(B,H): free, no data movement

    names = ("w1", "b1", "wih", "bih", "whh", "bhh_n", "wh1", "bh1", "wh2", "bh2")
    weights = [prepped[k] for k in names]

    def const_spec(a):  # full-array block, constant index -> resident across all chunks
        return pl.BlockSpec(a.shape, lambda t, _n=a.ndim: (0,) * _n)

    in_specs = ([pl.BlockSpec((B, TC, D), lambda t: (0, t, 0)),   # x: batch-first chunks
                 const_spec(h0_2d)]
                + [const_spec(w) for w in weights])
    out_shape = [jax.ShapeDtypeStruct((B, T, OUT), jnp.float32),
                 jax.ShapeDtypeStruct((B, H), jnp.float32)]
    out_specs = [pl.BlockSpec((B, TC, OUT), lambda t: (0, t, 0)),
                 pl.BlockSpec((B, H), lambda t: (0, 0))]          # resident h carry

    qs, state = pl.pallas_call(
        functools.partial(dueling_rnn_kernel, TC=TC, B=B, H=H, OUT=OUT),
        grid=(T // TC,),
        out_shape=out_shape,
        in_specs=in_specs,
        out_specs=out_specs,
        compiler_params=pltpu.CompilerParams(
            dimension_semantics=("arbitrary",),   # time is a serial recurrence
            vmem_limit_bytes=_vmem_limit_bytes([x_btd, h0_2d] + weights, out_shape)),
    )(x_btd, h0_2d, *weights)

    return qs, state.reshape(1, B, H)


def init_params(key, d_in, hidden, out):
    """Deterministic PyTorch-style uniform init (weights stored transposed: (in, out))."""
    ks = jax.random.split(key, 16)

    def u(k, shape, fan_in):
        s = 1.0 / math.sqrt(fan_in)
        return jax.random.uniform(k, shape, jnp.float32, -s, s)

    return {
        # fc1: Linear(d_in, 64)
        "w1": u(ks[0], (d_in, 64), d_in), "b1": u(ks[1], (1, 64), d_in),
        # GRU(64, hidden): gate order r, z, n
        "wih": u(ks[2], (64, 3 * hidden), hidden), "bih": u(ks[3], (1, 3 * hidden), hidden),
        "whh": u(ks[4], (hidden, 3 * hidden), hidden), "bhh": u(ks[5], (1, 3 * hidden), hidden),
        # value stream: Linear(hidden, 32) -> ReLU -> Linear(32, 1)
        "wv1": u(ks[6], (hidden, 32), hidden), "bv1": u(ks[7], (1, 32), hidden),
        "wv2": u(ks[8], (32, 1), 32), "bv2": u(ks[9], (1, 1), 32),
        # advantage stream: Linear(hidden, 32) -> ReLU -> Linear(32, out)
        "wa1": u(ks[10], (hidden, 32), hidden), "ba1": u(ks[11], (1, 32), hidden),
        "wa2": u(ks[12], (32, out), 32), "ba2": u(ks[13], (1, out), 32),
    }


def reference_forward(x, h0, p):
    """Pure-JAX reference matching PyTorch semantics."""
    B, T, D = x.shape
    H = h0.shape[-1]
    z1 = jax.nn.relu(x @ p["w1"] + p["b1"])  # (B, T, 64)

    def step(h, xt):
        gi = xt @ p["wih"] + p["bih"]
        gh = h @ p["whh"] + p["bhh"]
        r = jax.nn.sigmoid(gi[:, :H] + gh[:, :H])
        z = jax.nn.sigmoid(gi[:, H:2 * H] + gh[:, H:2 * H])
        n = jnp.tanh(gi[:, 2 * H:] + r * gh[:, 2 * H:])
        h_new = (1.0 - z) * n + z * h
        return h_new, h_new

    h_last, outs = jax.lax.scan(step, h0.reshape(B, H), jnp.transpose(z1, (1, 0, 2)))
    outs = jnp.transpose(outs, (1, 0, 2))  # (B, T, H)
    vh = jax.nn.relu(outs @ p["wv1"] + p["bv1"])
    v = vh @ p["wv2"] + p["bv2"]
    ah = jax.nn.relu(outs @ p["wa1"] + p["ba1"])
    a = ah @ p["wa2"] + p["ba2"]
    q = v + (a - jnp.mean(a, axis=-1, keepdims=True))
    return q, h_last.reshape(1, B, H)


if __name__ == "__main__":
    B, T, D_IN, OUT = 2, 16, 16, 6

    key = jax.random.PRNGKey(0)
    pkey, xkey = jax.random.split(key)
    x = jax.random.normal(xkey, (B, T, D_IN), jnp.float32)

    configs = [
        # (hidden, hoisted matmul dtype, tolerance)
        (32, jnp.float32, 5e-3),    # exercises the fused 3H<=128 recurrence path
        (32, jnp.bfloat16, 5e-2),   # recommended setting (bf16 inputs, f32 acc/gates)
        (128, jnp.bfloat16, 5e-2),  # module default H=128 -> per-gate recurrence path
    ]
    for hidden, mdt, tol in configs:
        params = init_params(jax.random.fold_in(pkey, hidden), D_IN, hidden, OUT)
        h0 = jnp.zeros((1, B, hidden), jnp.float32)  # get_initial_hidden
        q_ref, s_ref = reference_forward(x, h0, params)

        prepped = prepare_params(params, matmul_dtype=mdt)   # hoisted: once per param set
        qs, state = dueling_rnn_forward(x, h0, prepped, time_chunk=8)
        jax.block_until_ready((qs, state))

        assert qs.shape == (B, T, OUT) and state.shape == (1, B, hidden)
        assert jnp.allclose(qs, q_ref, atol=tol, rtol=tol), ("qs mismatch", hidden, mdt)
        assert jnp.allclose(state, s_ref, atol=tol, rtol=tol), ("state mismatch", hidden, mdt)

    print("KERNEL_OK")
</pallas_src>

<mosaic_0001>
module attributes {stable_mosaic.version = 11 : i64} {
  func.func @dueling_rnn_kernel(%arg0: i32, %arg1: memref<2x8x16xf32, #tpu.memory_space<vmem>>, %arg2: memref<2x32xf32, #tpu.memory_space<vmem>>, %arg3: memref<16x64xf32, #tpu.memory_space<vmem>>, %arg4: memref<1x64xf32, #tpu.memory_space<vmem>>, %arg5: memref<64x96xf32, #tpu.memory_space<vmem>>, %arg6: memref<1x96xf32, #tpu.memory_space<vmem>>, %arg7: memref<32x96xf32, #tpu.memory_space<vmem>>, %arg8: memref<1x32xf32, #tpu.memory_space<vmem>>, %arg9: memref<32x64xf32, #tpu.memory_space<vmem>>, %arg10: memref<1x64xf32, #tpu.memory_space<vmem>>, %arg11: memref<64x7xf32, #tpu.memory_space<vmem>>, %arg12: memref<1x7xf32, #tpu.memory_space<vmem>>, %arg13: memref<2x8x6xf32, #tpu.memory_space<vmem>>, %arg14: memref<2x32xf32, #tpu.memory_space<vmem>>) attributes {dimension_semantics = [#tpu.dimension_semantics<arbitrary>], iteration_bounds = array<i64: 2>, scalar_prefetch = 0 : i64, scratch_operands = 0 : i64, tpu.core_type = #tpu.core_type<tc>, window_params = [{transform_indices = @transform_0, window_bounds = array<i64: 2, 8, 16>}, {pipeline_mode = #tpu.pipeline_mode<synchronous>, transform_indices = @transform_1, window_bounds = array<i64: 2, 32>}, {pipeline_mode = #tpu.pipeline_mode<synchronous>, transform_indices = @transform_2, window_bounds = array<i64: 16, 64>}, {pipeline_mode = #tpu.pipeline_mode<synchronous>, transform_indices = @transform_3, window_bounds = array<i64: 1, 64>}, {pipeline_mode = #tpu.pipeline_mode<synchronous>, transform_indices = @transform_4, window_bounds = array<i64: 64, 96>}, {pipeline_mode = #tpu.pipeline_mode<synchronous>, transform_indices = @transform_5, window_bounds = array<i64: 1, 96>}, {pipeline_mode = #tpu.pipeline_mode<synchronous>, transform_indices = @transform_6, window_bounds = array<i64: 32, 96>}, {pipeline_mode = #tpu.pipeline_mode<synchronous>, transform_indices = @transform_7, window_bounds = array<i64: 1, 32>}, {pipeline_mode = #tpu.pipeline_mode<synchronous>, transform_indices = @transform_8, window_bounds = array<i64: 32, 64>}, {pipeline_mode = #tpu.pipeline_mode<synchronous>, transform_indices = @transform_9, window_bounds = array<i64: 1, 64>}, {pipeline_mode = #tpu.pipeline_mode<synchronous>, transform_indices = @transform_10, window_bounds = array<i64: 64, 7>}, {pipeline_mode = #tpu.pipeline_mode<synchronous>, transform_indices = @transform_11, window_bounds = array<i64: 1, 7>}, {transform_indices = @transform_12, window_bounds = array<i64: 2, 8, 6>}, {pipeline_mode = #tpu.pipeline_mode<synchronous>, transform_indices = @transform_13, window_bounds = array<i64: 2, 32>}]} {
    %c0_i32 = arith.constant 0 : i32
    %0 = arith.cmpi eq, %arg0, %c0_i32 : i32
    %1 = arith.extui %0 : i1 to i32
    %c0_i32_0 = arith.constant 0 : i32
    %2 = arith.cmpi ne, %1, %c0_i32_0 : i32
    scf.if %2 {
      %c0_69 = arith.constant 0 : index
      %c0_70 = arith.constant 0 : index
      %298 = vector.load %arg2[%c0_69, %c0_70] : memref<2x32xf32, #tpu.memory_space<vmem>>, vector<2x32xf32>
      %c0_71 = arith.constant 0 : index
      %c0_72 = arith.constant 0 : index
      %299 = vector.load %arg14[%c0_71, %c0_72] : memref<2x32xf32, #tpu.memory_space<vmem>>, vector<2x32xf32>
      tpu.vector_store %arg14[%c0_71, %c0_72], %298 {strides = array<i32>} : memref<2x32xf32, #tpu.memory_space<vmem>>, vector<2x32xf32>,
    } else {
    }
    %c0 = arith.constant 0 : index
    %c0_1 = arith.constant 0 : index
    %c0_2 = arith.constant 0 : index
    %3 = vector.load %arg1[%c0, %c0_1, %c0_2] : memref<2x8x16xf32, #tpu.memory_space<vmem>>, vector<2x8x16xf32>
    %4 = vector.shape_cast %3 : vector<2x8x16xf32> to vector<16x16xf32>
    %c0_3 = arith.constant 0 : index
    %c0_4 = arith.constant 0 : index
    %5 = vector.load %arg3[%c0_3, %c0_4] : memref<16x64xf32, #tpu.memory_space<vmem>>, vector<16x64xf32>
    %cst = arith.constant dense<0.000000e+00> : vector<16x64xf32>
    %6 = tpu.matmul %4, %5, %cst {dimension_numbers = #tpu.dot_dimension_numbers<[1], [0], [0], [1], [0, 0, 1, 1], [], []>} : vector<16x16xf32>, vector<16x64xf32>, vector<16x64xf32> -> vector<16x64xf32>
    %c0_5 = arith.constant 0 : index
    %c0_6 = arith.constant 0 : index
    %7 = vector.load %arg4[%c0_5, %c0_6] : memref<1x64xf32, #tpu.memory_space<vmem>>, vector<1x64xf32>
    %8 = vector.broadcast %7 : vector<1x64xf32> to vector<16x64xf32>
    %9 = arith.addf %6, %8 : vector<16x64xf32>
    %cst_7 = arith.constant 0.000000e+00 : f32
    %10 = vector.broadcast %cst_7 : f32 to vector<16x64xf32>
    %11 = arith.maximumf %9, %10 : vector<16x64xf32>
    %c0_8 = arith.constant 0 : index
    %c0_9 = arith.constant 0 : index
    %12 = vector.load %arg5[%c0_8, %c0_9] : memref<64x96xf32, #tpu.memory_space<vmem>>, vector<64x96xf32>
    %cst_10 = arith.constant dense<0.000000e+00> : vector<16x96xf32>
    %13 = tpu.matmul %11, %12, %cst_10 {dimension_numbers = #tpu.dot_dimension_numbers<[1], [0], [0], [1], [0, 0, 1, 1], [], []>} : vector<16x64xf32>, vector<64x96xf32>, vector<16x96xf32> -> vector<16x96xf32>
    %c0_11 = arith.constant 0 : index
    %c0_12 = arith.constant 0 : index
    %14 = vector.load %arg6[%c0_11, %c0_12] : memref<1x96xf32, #tpu.memory_space<vmem>>, vector<1x96xf32>
    %15 = vector.broadcast %14 : vector<1x96xf32> to vector<16x96xf32>
    %16 = arith.addf %13, %15 : vector<16x96xf32>
    %17 = vector.shape_cast %16 : vector<16x96xf32> to vector<2x8x96xf32>
    %c0_13 = arith.constant 0 : index
    %c0_14 = arith.constant 0 : index
    %18 = vector.load %arg7[%c0_13, %c0_14] : memref<32x96xf32, #tpu.memory_space<vmem>>, vector<32x96xf32>
    %c0_15 = arith.constant 0 : index
    %c0_16 = arith.constant 0 : index
    %19 = vector.load %arg8[%c0_15, %c0_16] : memref<1x32xf32, #tpu.memory_space<vmem>>, vector<1x32xf32>
    %20 = vector.shape_cast %19 : vector<1x32xf32> to vector<1x32xf32>
    %21 = vector.broadcast %20 : vector<1x32xf32> to vector<2x32xf32>
    %c0_17 = arith.constant 0 : index
    %c0_18 = arith.constant 0 : index
    %22 = vector.load %arg14[%c0_17, %c0_18] : memref<2x32xf32, #tpu.memory_space<vmem>>, vector<2x32xf32>
    %cst_19 = arith.constant dense<0.000000e+00> : vector<2x96xf32>
    %23 = tpu.matmul %22, %18, %cst_19 {dimension_numbers = #tpu.dot_dimension_numbers<[1], [0], [0], [1], [0, 0, 1, 1], [], []>} : vector<2x32xf32>, vector<32x96xf32>, vector<2x96xf32> -> vector<2x96xf32>
    %24 = vector.extract_strided_slice %23 {offsets = [0, 0], sizes = [2, 32], strides = [1, 1]} : vector<2x96xf32> to vector<2x32xf32>
    %25 = vector.extract_strided_slice %23 {offsets = [0, 32], sizes = [2, 32], strides = [1, 1]} : vector<2x96xf32> to vector<2x32xf32>
    %26 = vector.extract_strided_slice %23 {offsets = [0, 64], sizes = [2, 32], strides = [1, 1]} : vector<2x96xf32> to vector<2x32xf32>
    %27 = vector.extract_strided_slice %17 {offsets = [0, 0, 0], sizes = [2, 1, 96], strides = [1, 1, 1]} : vector<2x8x96xf32> to vector<2x1x96xf32>
    %28 = vector.shape_cast %27 : vector<2x1x96xf32> to vector<2x96xf32>
    %29 = vector.extract_strided_slice %28 {offsets = [0, 0], sizes = [2, 32], strides = [1, 1]} : vector<2x96xf32> to vector<2x32xf32>
    %30 = arith.addf %29, %24 : vector<2x32xf32>
    %31 = arith.negf %30 : vector<2x32xf32>
    %32 = math.exp %31 : vector<2x32xf32>
    %cst_20 = arith.constant 1.000000e+00 : f32
    %33 = vector.broadcast %cst_20 : f32 to vector<2x32xf32>
    %34 = arith.addf %33, %32 : vector<2x32xf32>
    %35 = arith.divf %33, %34 : vector<2x32xf32>
    %36 = vector.extract_strided_slice %28 {offsets = [0, 32], sizes = [2, 32], strides = [1, 1]} : vector<2x96xf32> to vector<2x32xf32>
    %37 = arith.addf %36, %25 : vector<2x32xf32>
    %38 = arith.negf %37 : vector<2x32xf32>
    %39 = math.exp %38 : vector<2x32xf32>
    %cst_21 = arith.constant 1.000000e+00 : f32
    %40 = vector.broadcast %cst_21 : f32 to vector<2x32xf32>
    %41 = arith.addf %40, %39 : vector<2x32xf32>
    %42 = arith.divf %40, %41 : vector<2x32xf32>
    %43 = vector.extract_strided_slice %28 {offsets = [0, 64], sizes = [2, 32], strides = [1, 1]} : vector<2x96xf32> to vector<2x32xf32>
    %44 = arith.addf %26, %21 : vector<2x32xf32>
    %45 = arith.mulf %35, %44 : vector<2x32xf32>
    %46 = arith.addf %43, %45 : vector<2x32xf32>
    %47 = math.tanh %46 : vector<2x32xf32>
    %cst_22 = arith.constant 1.000000e+00 : f32
    %48 = vector.broadcast %cst_22 : f32 to vector<2x32xf32>
    %49 = arith.subf %48, %42 : vector<2x32xf32>
    %50 = arith.mulf %49, %47 : vector<2x32xf32>
    %51 = arith.mulf %42, %22 : vector<2x32xf32>
    %52 = arith.addf %50, %51 : vector<2x32xf32>
    %cst_23 = arith.constant dense<0.000000e+00> : vector<2x96xf32>
    %53 = tpu.matmul %52, %18, %cst_23 {dimension_numbers = #tpu.dot_dimension_numbers<[1], [0], [0], [1], [0, 0, 1, 1], [], []>} : vector<2x32xf32>, vector<32x96xf32>, vector<2x96xf32> -> vector<2x96xf32>
    %54 = vector.extract_strided_slice %53 {offsets = [0, 0], sizes = [2, 32], strides = [1, 1]} : vector<2x96xf32> to vector<2x32xf32>
    %55 = vector.extract_strided_slice %53 {offsets = [0, 32], sizes = [2, 32], strides = [1, 1]} : vector<2x96xf32> to vector<2x32xf32>
    %56 = vector.extract_strided_slice %53 {offsets = [0, 64], sizes = [2, 32], strides = [1, 1]} : vector<2x96xf32> to vector<2x32xf32>
    %57 = vector.extract_strided_slice %17 {offsets = [0, 1, 0], sizes = [2, 1, 96], strides = [1, 1, 1]} : vector<2x8x96xf32> to vector<2x1x96xf32>
    %58 = vector.shape_cast %57 : vector<2x1x96xf32> to vector<2x96xf32>
    %59 = vector.extract_strided_slice %58 {offsets = [0, 0], sizes = [2, 32], strides = [1, 1]} : vector<2x96xf32> to vector<2x32xf32>
    %60 = arith.addf %59, %54 : vector<2x32xf32>
    %61 = arith.negf %60 : vector<2x32xf32>
    %62 = math.exp %61 : vector<2x32xf32>
    %cst_24 = arith.constant 1.000000e+00 : f32
    %63 = vector.broadcast %cst_24 : f32 to vector<2x32xf32>
    %64 = arith.addf %63, %62 : vector<2x32xf32>
    %65 = arith.divf %63, %64 : vector<2x32xf32>
    %66 = vector.extract_strided_slice %58 {offsets = [0, 32], sizes = [2, 32], strides = [1, 1]} : vector<2x96xf32> to vector<2x32xf32>
    %67 = arith.addf %66, %55 : vector<2x32xf32>
    %68 = arith.negf %67 : vector<2x32xf32>
    %69 = math.exp %68 : vector<2x32xf32>
    %cst_25 = arith.constant 1.000000e+00 : f32
    %70 = vector.broadcast %cst_25 : f32 to vector<2x32xf32>
    %71 = arith.addf %70, %69 : vector<2x32xf32>
    %72 = arith.divf %70, %71 : vector<2x32xf32>
    %73 = vector.extract_strided_slice %58 {offsets = [0, 64], sizes = [2, 32], strides = [1, 1]} : vector<2x96xf32> to vector<2x32xf32>
    %74 = arith.addf %56, %21 : vector<2x32xf32>
    %75 = arith.mulf %65, %74 : vector<2x32xf32>
    %76 = arith.addf %73, %75 : vector<2x32xf32>
    %77 = math.tanh %76 : vector<2x32xf32>
    %cst_26 = arith.constant 1.000000e+00 : f32
    %78 = vector.broadcast %cst_26 : f32 to vector<2x32xf32>
    %79 = arith.subf %78, %72 : vector<2x32xf32>
    %80 = arith.mulf %79, %77 : vector<2x32xf32>
    %81 = arith.mulf %72, %52 : vector<2x32xf32>
    %82 = arith.addf %80, %81 : vector<2x32xf32>
    %cst_27 = arith.constant dense<0.000000e+00> : vector<2x96xf32>
    %83 = tpu.matmul %82, %18, %cst_27 {dimension_numbers = #tpu.dot_dimension_numbers<[1], [0], [0], [1], [0, 0, 1, 1], [], []>} : vector<2x32xf32>, vector<32x96xf32>, vector<2x96xf32> -> vector<2x96xf32>
    %84 = vector.extract_strided_slice %83 {offsets = [0, 0], sizes = [2, 32], strides = [1, 1]} : vector<2x96xf32> to vector<2x32xf32>
    %85 = vector.extract_strided_slice %83 {offsets = [0, 32], sizes = [2, 32], strides = [1, 1]} : vector<2x96xf32> to vector<2x32xf32>
    %86 = vector.extract_strided_slice %83 {offsets = [0, 64], sizes = [2, 32], strides = [1, 1]} : vector<2x96xf32> to vector<2x32xf32>
    %87 = vector.extract_strided_slice %17 {offsets = [0, 2, 0], sizes = [2, 1, 96], strides = [1, 1, 1]} : vector<2x8x96xf32> to vector<2x1x96xf32>
    %88 = vector.shape_cast %87 : vector<2x1x96xf32> to vector<2x96xf32>
    %89 = vector.extract_strided_slice %88 {offsets = [0, 0], sizes = [2, 32], strides = [1, 1]} : vector<2x96xf32> to vector<2x32xf32>
    %90 = arith.addf %89, %84 : vector<2x32xf32>
    %91 = arith.negf %90 : vector<2x32xf32>
    %92 = math.exp %91 : vector<2x32xf32>
    %cst_28 = arith.constant 1.000000e+00 : f32
    %93 = vector.broadcast %cst_28 : f32 to vector<2x32xf32>
    %94 = arith.addf %93, %92 : vector<2x32xf32>
    %95 = arith.divf %93, %94 : vector<2x32xf32>
    %96 = vector.extract_strided_slice %88 {offsets = [0, 32], sizes = [2, 32], strides = [1, 1]} : vector<2x96xf32> to vector<2x32xf32>
    %97 = arith.addf %96, %85 : vector<2x32xf32>
    %98 = arith.negf %97 : vector<2x32xf32>
    %99 = math.exp %98 : vector<2x32xf32>
    %cst_29 = arith.constant 1.000000e+00 : f32
    %100 = vector.broadcast %cst_29 : f32 to vector<2x32xf32>
    %101 = arith.addf %100, %99 : vector<2x32xf32>
    %102 = arith.divf %100, %101 : vector<2x32xf32>
    %103 = vector.extract_strided_slice %88 {offsets = [0, 64], sizes = [2, 32], strides = [1, 1]} : vector<2x96xf32> to vector<2x32xf32>
    %104 = arith.addf %86, %21 : vector<2x32xf32>
    %105 = arith.mulf %95, %104 : vector<2x32xf32>
    %106 = arith.addf %103, %105 : vector<2x32xf32>
    %107 = math.tanh %106 : vector<2x32xf32>
    %cst_30 = arith.constant 1.000000e+00 : f32
    %108 = vector.broadcast %cst_30 : f32 to vector<2x32xf32>
    %109 = arith.subf %108, %102 : vector<2x32xf32>
    %110 = arith.mulf %109, %107 : vector<2x32xf32>
    %111 = arith.mulf %102, %82 : vector<2x32xf32>
    %112 = arith.addf %110, %111 : vector<2x32xf32>
    %cst_31 = arith.constant dense<0.000000e+00> : vector<2x96xf32>
    %113 = tpu.matmul %112, %18, %cst_31 {dimension_numbers = #tpu.dot_dimension_numbers<[1], [0], [0], [1], [0, 0, 1, 1], [], []>} : vector<2x32xf32>, vector<32x96xf32>, vector<2x96xf32> -> vector<2x96xf32>
    %114 = vector.extract_strided_slice %113 {offsets = [0, 0], sizes = [2, 32], strides = [1, 1]} : vector<2x96xf32> to vector<2x32xf32>
    %115 = vector.extract_strided_slice %113 {offsets = [0, 32], sizes = [2, 32], strides = [1, 1]} : vector<2x96xf32> to vector<2x32xf32>
    %116 = vector.extract_strided_slice %113 {offsets = [0, 64], sizes = [2, 32], strides = [1, 1]} : vector<2x96xf32> to vector<2x32xf32>
    %117 = vector.extract_strided_slice %17 {offsets = [0, 3, 0], sizes = [2, 1, 96], strides = [1, 1, 1]} : vector<2x8x96xf32> to vector<2x1x96xf32>
    %118 = vector.shape_cast %117 : vector<2x1x96xf32> to vector<2x96xf32>
    %119 = vector.extract_strided_slice %118 {offsets = [0, 0], sizes = [2, 32], strides = [1, 1]} : vector<2x96xf32> to vector<2x32xf32>
    %120 = arith.addf %119, %114 : vector<2x32xf32>
    %121 = arith.negf %120 : vector<2x32xf32>
    %122 = math.exp %121 : vector<2x32xf32>
    %cst_32 = arith.constant 1.000000e+00 : f32
    %123 = vector.broadcast %cst_32 : f32 to vector<2x32xf32>
    %124 = arith.addf %123, %122 : vector<2x32xf32>
    %125 = arith.divf %123, %124 : vector<2x32xf32>
    %126 = vector.extract_strided_slice %118 {offsets = [0, 32], sizes = [2, 32], strides = [1, 1]} : vector<2x96xf32> to vector<2x32xf32>
    %127 = arith.addf %126, %115 : vector<2x32xf32>
    %128 = arith.negf %127 : vector<2x32xf32>
    %129 = math.exp %128 : vector<2x32xf32>
    %cst_33 = arith.constant 1.000000e+00 : f32
    %130 = vector.broadcast %cst_33 : f32 to vector<2x32xf32>
    %131 = arith.addf %130, %129 : vector<2x32xf32>
    %132 = arith.divf %130, %131 : vector<2x32xf32>
    %133 = vector.extract_strided_slice %118 {offsets = [0, 64], sizes = [2, 32], strides = [1, 1]} : vector<2x96xf32> to vector<2x32xf32>
    %134 = arith.addf %116, %21 : vector<2x32xf32>
    %135 = arith.mulf %125, %134 : vector<2x32xf32>
    %136 = arith.addf %133, %135 : vector<2x32xf32>
    %137 = math.tanh %136 : vector<2x32xf32>
    %cst_34 = arith.constant 1.000000e+00 : f32
    %138 = vector.broadcast %cst_34 : f32 to vector<2x32xf32>
    %139 = arith.subf %138, %132 : vector<2x32xf32>
    %140 = arith.mulf %139, %137 : vector<2x32xf32>
    %141 = arith.mulf %132, %112 : vector<2x32xf32>
    %142 = arith.addf %140, %141 : vector<2x32xf32>
    %cst_35 = arith.constant dense<0.000000e+00> : vector<2x96xf32>
    %143 = tpu.matmul %142, %18, %cst_35 {dimension_numbers = #tpu.dot_dimension_numbers<[1], [0], [0], [1], [0, 0, 1, 1], [], []>} : vector<2x32xf32>, vector<32x96xf32>, vector<2x96xf32> -> vector<2x96xf32>
    %144 = vector.extract_strided_slice %143 {offsets = [0, 0], sizes = [2, 32], strides = [1, 1]} : vector<2x96xf32> to vector<2x32xf32>
    %145 = vector.extract_strided_slice %143 {offsets = [0, 32], sizes = [2, 32], strides = [1, 1]} : vector<2x96xf32> to vector<2x32xf32>
    %146 = vector.extract_strided_slice %143 {offsets = [0, 64], sizes = [2, 32], strides = [1, 1]} : vector<2x96xf32> to vector<2x32xf32>
    %147 = vector.extract_strided_slice %17 {offsets = [0, 4, 0], sizes = [2, 1, 96], strides = [1, 1, 1]} : vector<2x8x96xf32> to vector<2x1x96xf32>
    %148 = vector.shape_cast %147 : vector<2x1x96xf32> to vector<2x96xf32>
    %149 = vector.extract_strided_slice %148 {offsets = [0, 0], sizes = [2, 32], strides = [1, 1]} : vector<2x96xf32> to vector<2x32xf32>
    %150 = arith.addf %149, %144 : vector<2x32xf32>
    %151 = arith.negf %150 : vector<2x32xf32>
    %152 = math.exp %151 : vector<2x32xf32>
    %cst_36 = arith.constant 1.000000e+00 : f32
    %153 = vector.broadcast %cst_36 : f32 to vector<2x32xf32>
    %154 = arith.addf %153, %152 : vector<2x32xf32>
    %155 = arith.divf %153, %154 : vector<2x32xf32>
    %156 = vector.extract_strided_slice %148 {offsets = [0, 32], sizes = [2, 32], strides = [1, 1]} : vector<2x96xf32> to vector<2x32xf32>
    %157 = arith.addf %156, %145 : vector<2x32xf32>
    %158 = arith.negf %157 : vector<2x32xf32>
    %159 = math.exp %158 : vector<2x32xf32>
    %cst_37 = arith.constant 1.000000e+00 : f32
    %160 = vector.broadcast %cst_37 : f32 to vector<2x32xf32>
    %161 = arith.addf %160, %159 : vector<2x32xf32>
    %162 = arith.divf %160, %161 : vector<2x32xf32>
    %163 = vector.extract_strided_slice %148 {offsets = [0, 64], sizes = [2, 32], strides = [1, 1]} : vector<2x96xf32> to vector<2x32xf32>
    %164 = arith.addf %146, %21 : vector<2x32xf32>
    %165 = arith.mulf %155, %164 : vector<2x32xf32>
    %166 = arith.addf %163, %165 : vector<2x32xf32>
    %167 = math.tanh %166 : vector<2x32xf32>
    %cst_38 = arith.constant 1.000000e+00 : f32
    %168 = vector.broadcast %cst_38 : f32 to vector<2x32xf32>
    %169 = arith.subf %168, %162 : vector<2x32xf32>
    %170 = arith.mulf %169, %167 : vector<2x32xf32>
    %171 = arith.mulf %162, %142 : vector<2x32xf32>
    %172 = arith.addf %170, %171 : vector<2x32xf32>
    %cst_39 = arith.constant dense<0.000000e+00> : vector<2x96xf32>
    %173 = tpu.matmul %172, %18, %cst_39 {dimension_numbers = #tpu.dot_dimension_numbers<[1], [0], [0], [1], [0, 0, 1, 1], [], []>} : vector<2x32xf32>, vector<32x96xf32>, vector<2x96xf32> -> vector<2x96xf32>
    %174 = vector.extract_strided_slice %173 {offsets = [0, 0], sizes = [2, 32], strides = [1, 1]} : vector<2x96xf32> to vector<2x32xf32>
    %175 = vector.extract_strided_slice %173 {offsets = [0, 32], sizes = [2, 32], strides = [1, 1]} : vector<2x96xf32> to vector<2x32xf32>
    %176 = vector.extract_strided_slice %173 {offsets = [0, 64], sizes = [2, 32], strides = [1, 1]} : vector<2x96xf32> to vector<2x32xf32>
    %177 = vector.extract_strided_slice %17 {offsets = [0, 5, 0], sizes = [2, 1, 96], strides = [1, 1, 1]} : vector<2x8x96xf32> to vector<2x1x96xf32>
    %178 = vector.shape_cast %177 : vector<2x1x96xf32> to vector<2x96xf32>
    %179 = vector.extract_strided_slice %178 {offsets = [0, 0], sizes = [2, 32], strides = [1, 1]} : vector<2x96xf32> to vector<2x32xf32>
    %180 = arith.addf %179, %174 : vector<2x32xf32>
    %181 = arith.negf %180 : vector<2x32xf32>
    %182 = math.exp %181 : vector<2x32xf32>
    %cst_40 = arith.constant 1.000000e+00 : f32
    %183 = vector.broadcast %cst_40 : f32 to vector<2x32xf32>
    %184 = arith.addf %183, %182 : vector<2x32xf32>
    %185 = arith.divf %183, %184 : vector<2x32xf32>
    %186 = vector.extract_strided_slice %178 {offsets = [0, 32], sizes = [2, 32], strides = [1, 1]} : vector<2x96xf32> to vector<2x32xf32>
    %187 = arith.addf %186, %175 : vector<2x32xf32>
    %188 = arith.negf %187 : vector<2x32xf32>
    %189 = math.exp %188 : vector<2x32xf32>
    %cst_41 = arith.constant 1.000000e+00 : f32
    %190 = vector.broadcast %cst_41 : f32 to vector<2x32xf32>
    %191 = arith.addf %190, %189 : vector<2x32xf32>
    %192 = arith.divf %190, %191 : vector<2x32xf32>
    %193 = vector.extract_strided_slice %178 {offsets = [0, 64], sizes = [2, 32], strides = [1, 1]} : vector<2x96xf32> to vector<2x32xf32>
    %194 = arith.addf %176, %21 : vector<2x32xf32>
    %195 = arith.mulf %185, %194 : vector<2x32xf32>
    %196 = arith.addf %193, %195 : vector<2x32xf32>
    %197 = math.tanh %196 : vector<2x32xf32>
    %cst_42 = arith.constant 1.000000e+00 : f32
    %198 = vector.broadcast %cst_42 : f32 to vector<2x32xf32>
    %199 = arith.subf %198, %192 : vector<2x32xf32>
    %200 = arith.mulf %199, %197 : vector<2x32xf32>
    %201 = arith.mulf %192, %172 : vector<2x32xf32>
    %202 = arith.addf %200, %201 : vector<2x32xf32>
    %cst_43 = arith.constant dense<0.000000e+00> : vector<2x96xf32>
    %203 = tpu.matmul %202, %18, %cst_43 {dimension_numbers = #tpu.dot_dimension_numbers<[1], [0], [0], [1], [0, 0, 1, 1], [], []>} : vector<2x32xf32>, vector<32x96xf32>, vector<2x96xf32> -> vector<2x96xf32>
    %204 = vector.extract_strided_slice %203 {offsets = [0, 0], sizes = [2, 32], strides = [1, 1]} : vector<2x96xf32> to vector<2x32xf32>
    %205 = vector.extract_strided_slice %203 {offsets = [0, 32], sizes = [2, 32], strides = [1, 1]} : vector<2x96xf32> to vector<2x32xf32>
    %206 = vector.extract_strided_slice %203 {offsets = [0, 64], sizes = [2, 32], strides = [1, 1]} : vector<2x96xf32> to vector<2x32xf32>
    %207 = vector.extract_strided_slice %17 {offsets = [0, 6, 0], sizes = [2, 1, 96], strides = [1, 1, 1]} : vector<2x8x96xf32> to vector<2x1x96xf32>
    %208 = vector.shape_cast %207 : vector<2x1x96xf32> to vector<2x96xf32>
    %209 = vector.extract_strided_slice %208 {offsets = [0, 0], sizes = [2, 32], strides = [1, 1]} : vector<2x96xf32> to vector<2x32xf32>
    %210 = arith.addf %209, %204 : vector<2x32xf32>
    %211 = arith.negf %210 : vector<2x32xf32>
    %212 = math.exp %211 : vector<2x32xf32>
    %cst_44 = arith.constant 1.000000e+00 : f32
    %213 = vector.broadcast %cst_44 : f32 to vector<2x32xf32>
    %214 = arith.addf %213, %212 : vector<2x32xf32>
    %215 = arith.divf %213, %214 : vector<2x32xf32>
    %216 = vector.extract_strided_slice %208 {offsets = [0, 32], sizes = [2, 32], strides = [1, 1]} : vector<2x96xf32> to vector<2x32xf32>
    %217 = arith.addf %216, %205 : vector<2x32xf32>
    %218 = arith.negf %217 : vector<2x32xf32>
    %219 = math.exp %218 : vector<2x32xf32>
    %cst_45 = arith.constant 1.000000e+00 : f32
    %220 = vector.broadcast %cst_45 : f32 to vector<2x32xf32>
    %221 = arith.addf %220, %219 : vector<2x32xf32>
    %222 = arith.divf %220, %221 : vector<2x32xf32>
    %223 = vector.extract_strided_slice %208 {offsets = [0, 64], sizes = [2, 32], strides = [1, 1]} : vector<2x96xf32> to vector<2x32xf32>
    %224 = arith.addf %206, %21 : vector<2x32xf32>
    %225 = arith.mulf %215, %224 : vector<2x32xf32>
    %226 = arith.addf %223, %225 : vector<2x32xf32>
    %227 = math.tanh %226 : vector<2x32xf32>
    %cst_46 = arith.constant 1.000000e+00 : f32
    %228 = vector.broadcast %cst_46 : f32 to vector<2x32xf32>
    %229 = arith.subf %228, %222 : vector<2x32xf32>
    %230 = arith.mulf %229, %227 : vector<2x32xf32>
    %231 = arith.mulf %222, %202 : vector<2x32xf32>
    %232 = arith.addf %230, %231 : vector<2x32xf32>
    %cst_47 = arith.constant dense<0.000000e+00> : vector<2x96xf32>
    %233 = tpu.matmul %232, %18, %cst_47 {dimension_numbers = #tpu.dot_dimension_numbers<[1], [0], [0], [1], [0, 0, 1, 1], [], []>} : vector<2x32xf32>, vector<32x96xf32>, vector<2x96xf32> -> vector<2x96xf32>
    %234 = vector.extract_strided_slice %233 {offsets = [0, 0], sizes = [2, 32], strides = [1, 1]} : vector<2x96xf32> to vector<2x32xf32>
    %235 = vector.extract_strided_slice %233 {offsets = [0, 32], sizes = [2, 32], strides = [1, 1]} : vector<2x96xf32> to vector<2x32xf32>
    %236 = vector.extract_strided_slice %233 {offsets = [0, 64], sizes = [2, 32], strides = [1, 1]} : vector<2x96xf32> to vector<2x32xf32>
    %237 = vector.extract_strided_slice %17 {offsets = [0, 7, 0], sizes = [2, 1, 96], strides = [1, 1, 1]} : vector<2x8x96xf32> to vector<2x1x96xf32>
    %238 = vector.shape_cast %237 : vector<2x1x96xf32> to vector<2x96xf32>
    %239 = vector.extract_strided_slice %238 {offsets = [0, 0], sizes = [2, 32], strides = [1, 1]} : vector<2x96xf32> to vector<2x32xf32>
    %240 = arith.addf %239, %234 : vector<2x32xf32>
    %241 = arith.negf %240 : vector<2x32xf32>
    %242 = math.exp %241 : vector<2x32xf32>
    %cst_48 = arith.constant 1.000000e+00 : f32
    %243 = vector.broadcast %cst_48 : f32 to vector<2x32xf32>
    %244 = arith.addf %243, %242 : vector<2x32xf32>
    %245 = arith.divf %243, %244 : vector<2x32xf32>
    %246 = vector.extract_strided_slice %238 {offsets = [0, 32], sizes = [2, 32], strides = [1, 1]} : vector<2x96xf32> to vector<2x32xf32>
    %247 = arith.addf %246, %235 : vector<2x32xf32>
    %248 = arith.negf %247 : vector<2x32xf32>
    %249 = math.exp %248 : vector<2x32xf32>
    %cst_49 = arith.constant 1.000000e+00 : f32
    %250 = vector.broadcast %cst_49 : f32 to vector<2x32xf32>
    %251 = arith.addf %250, %249 : vector<2x32xf32>
    %252 = arith.divf %250, %251 : vector<2x32xf32>
    %253 = vector.extract_strided_slice %238 {offsets = [0, 64], sizes = [2, 32], strides = [1, 1]} : vector<2x96xf32> to vector<2x32xf32>
    %254 = arith.addf %236, %21 : vector<2x32xf32>
    %255 = arith.mulf %245, %254 : vector<2x32xf32>
    %256 = arith.addf %253, %255 : vector<2x32xf32>
    %257 = math.tanh %256 : vector<2x32xf32>
    %cst_50 = arith.constant 1.000000e+00 : f32
    %258 = vector.broadcast %cst_50 : f32 to vector<2x32xf32>
    %259 = arith.subf %258, %252 : vector<2x32xf32>
    %260 = arith.mulf %259, %257 : vector<2x32xf32>
    %261 = arith.mulf %252, %232 : vector<2x32xf32>
    %262 = arith.addf %260, %261 : vector<2x32xf32>
    %c0_51 = arith.constant 0 : index
    %c0_52 = arith.constant 0 : index
    %263 = vector.load %arg14[%c0_51, %c0_52] : memref<2x32xf32, #tpu.memory_space<vmem>>, vector<2x32xf32>
    tpu.vector_store %arg14[%c0_51, %c0_52], %262 {strides = array<i32>} : memref<2x32xf32, #tpu.memory_space<vmem>>, vector<2x32xf32>,
    %264 = vector.shape_cast %52 : vector<2x32xf32> to vector<2x1x32xf32>
    %265 = vector.shape_cast %82 : vector<2x32xf32> to vector<2x1x32xf32>
    %266 = vector.shape_cast %112 : vector<2x32xf32> to vector<2x1x32xf32>
    %267 = vector.shape_cast %142 : vector<2x32xf32> to vector<2x1x32xf32>
    %268 = vector.shape_cast %172 : vector<2x32xf32> to vector<2x1x32xf32>
    %269 = vector.shape_cast %202 : vector<2x32xf32> to vector<2x1x32xf32>
    %270 = vector.shape_cast %232 : vector<2x32xf32> to vector<2x1x32xf32>
    %271 = vector.shape_cast %262 : vector<2x32xf32> to vector<2x1x32xf32>
    %272 = tpu.concatenate %264, %265, %266, %267, %268, %269, %270, %271 in 1 : vector<2x1x32xf32>, vector<2x1x32xf32>, vector<2x1x32xf32>, vector<2x1x32xf32>, vector<2x1x32xf32>, vector<2x1x32xf32>, vector<2x1x32xf32>, vector<2x1x32xf32> -> vector<2x8x32xf32>
    %273 = vector.shape_cast %272 : vector<2x8x32xf32> to vector<16x32xf32>
    %c0_53 = arith.constant 0 : index
    %c0_54 = arith.constant 0 : index
    %274 = vector.load %arg9[%c0_53, %c0_54] : memref<32x64xf32, #tpu.memory_space<vmem>>, vector<32x64xf32>
    %cst_55 = arith.constant dense<0.000000e+00> : vector<16x64xf32>
    %275 = tpu.matmul %273, %274, %cst_55 {dimension_numbers = #tpu.dot_dimension_numbers<[1], [0], [0], [1], [0, 0, 1, 1], [], []>} : vector<16x32xf32>, vector<32x64xf32>, vector<16x64xf32> -> vector<16x64xf32>
    %c0_56 = arith.constant 0 : index
    %c0_57 = arith.constant 0 : index
    %276 = vector.load %arg10[%c0_56, %c0_57] : memref<1x64xf32, #tpu.memory_space<vmem>>, vector<1x64xf32>
    %277 = vector.broadcast %276 : vector<1x64xf32> to vector<16x64xf32>
    %278 = arith.addf %275, %277 : vector<16x64xf32>
    %cst_58 = arith.constant 0.000000e+00 : f32
    %279 = vector.broadcast %cst_58 : f32 to vector<16x64xf32>
    %280 = arith.maximumf %278, %279 : vector<16x64xf32>
    %c0_59 = arith.constant 0 : index
    %c0_60 = arith.constant 0 : index
    %281 = vector.load %arg11[%c0_59, %c0_60] : memref<64x7xf32, #tpu.memory_space<vmem>>, vector<64x7xf32>
    %cst_61 = arith.constant dense<0.000000e+00> : vector<16x7xf32>
    %282 = tpu.matmul %280, %281, %cst_61 {dimension_numbers = #tpu.dot_dimension_numbers<[1], [0], [0], [1], [0, 0, 1, 1], [], []>} : vector<16x64xf32>, vector<64x7xf32>, vector<16x7xf32> -> vector<16x7xf32>
    %c0_62 = arith.constant 0 : index
    %c0_63 = arith.constant 0 : index
    %283 = vector.load %arg12[%c0_62, %c0_63] : memref<1x7xf32, #tpu.memory_space<vmem>>, vector<1x7xf32>
    %284 = vector.broadcast %283 : vector<1x7xf32> to vector<16x7xf32>
    %285 = arith.addf %282, %284 : vector<16x7xf32>
    %286 = vector.extract_strided_slice %285 {offsets = [0, 0], sizes = [16, 6], strides = [1, 1]} : vector<16x7xf32> to vector<16x6xf32>
    %287 = vector.extract_strided_slice %285 {offsets = [0, 6], sizes = [16, 1], strides = [1, 1]} : vector<16x7xf32> to vector<16x1xf32>
    %cst_64 = arith.constant dense<0.000000e+00> : vector<16xf32>
    %288 = vector.multi_reduction <add>, %286, %cst_64 [1] : vector<16x6xf32> to vector<16xf32>
    %289 = vector.shape_cast %288 : vector<16xf32> to vector<16x1xf32>
    %cst_65 = arith.constant 6.000000e+00 : f32
    %290 = vector.broadcast %cst_65 : f32 to vector<16x1xf32>
    %291 = arith.divf %289, %290 : vector<16x1xf32>
    %292 = vector.broadcast %291 : vector<16x1xf32> to vector<16x6xf32>
    %293 = arith.subf %286, %292 : vector<16x6xf32>
    %294 = vector.broadcast %287 : vector<16x1xf32> to vector<16x6xf32>
    %295 = arith.addf %294, %293 : vector<16x6xf32>
    %296 = vector.shape_cast %295 : vector<16x6xf32> to vector<2x8x6xf32>
    %c0_66 = arith.constant 0 : index
    %c0_67 = arith.constant 0 : index
    %c0_68 = arith.constant 0 : index
    %297 = vector.load %arg13[%c0_66, %c0_67, %c0_68] : memref<2x8x6xf32, #tpu.memory_space<vmem>>, vector<2x8x6xf32>
    tpu.vector_store %arg13[%c0_66, %c0_67, %c0_68], %296 {strides = array<i32>} : memref<2x8x6xf32, #tpu.memory_space<vmem>>, vector<2x8x6xf32>,
    return
  }
  func.func @transform_0(%arg0: i32) -> (i32, i32, i32) {
    %c0_i32 = arith.constant 0 : i32
    %c0_i32_0 = arith.constant 0 : i32
    %c0_i32_1 = arith.constant 0 : i32
    return %c0_i32, %arg0, %c0_i32_0 : i32, i32, i32
  }
  func.func @transform_1(%arg0: i32) -> (i32, i32) {
    %c0_i32 = arith.constant 0 : i32
    %c0_i32_0 = arith.constant 0 : i32
    %c0_i32_1 = arith.constant 0 : i32
    return %c0_i32, %c0_i32_0 : i32, i32
  }
  func.func @transform_2(%arg0: i32) -> (i32, i32) {
    %c0_i32 = arith.constant 0 : i32
    %c0_i32_0 = arith.constant 0 : i32
    %c0_i32_1 = arith.constant 0 : i32
    return %c0_i32, %c0_i32_0 : i32, i32
  }
  func.func @transform_3(%arg0: i32) -> (i32, i32) {
    %c0_i32 = arith.constant 0 : i32
    %c0_i32_0 = arith.constant 0 : i32
    %c0_i32_1 = arith.constant 0 : i32
    return %c0_i32, %c0_i32_0 : i32, i32
  }
  func.func @transform_4(%arg0: i32) -> (i32, i32) {
    %c0_i32 = arith.constant 0 : i32
    %c0_i32_0 = arith.constant 0 : i32
    %c0_i32_1 = arith.constant 0 : i32
    return %c0_i32, %c0_i32_0 : i32, i32
  }
  func.func @transform_5(%arg0: i32) -> (i32, i32) {
    %c0_i32 = arith.constant 0 : i32
    %c0_i32_0 = arith.constant 0 : i32
    %c0_i32_1 = arith.constant 0 : i32
    return %c0_i32, %c0_i32_0 : i32, i32
  }
  func.func @transform_6(%arg0: i32) -> (i32, i32) {
    %c0_i32 = arith.constant 0 : i32
    %c0_i32_0 = arith.constant 0 : i32
    %c0_i32_1 = arith.constant 0 : i32
    return %c0_i32, %c0_i32_0 : i32, i32
  }
  func.func @transform_7(%arg0: i32) -> (i32, i32) {
    %c0_i32 = arith.constant 0 : i32
    %c0_i32_0 = arith.constant 0 : i32
    %c0_i32_1 = arith.constant 0 : i32
    return %c0_i32, %c0_i32_0 : i32, i32
  }
  func.func @transform_8(%arg0: i32) -> (i32, i32) {
    %c0_i32 = arith.constant 0 : i32
    %c0_i32_0 = arith.constant 0 : i32
    %c0_i32_1 = arith.constant 0 : i32
    return %c0_i32, %c0_i32_0 : i32, i32
  }
  func.func @transform_9(%arg0: i32) -> (i32, i32) {
    %c0_i32 = arith.constant 0 : i32
    %c0_i32_0 = arith.constant 0 : i32
    %c0_i32_1 = arith.constant 0 : i32
    return %c0_i32, %c0_i32_0 : i32, i32
  }
  func.func @transform_10(%arg0: i32) -> (i32, i32) {
    %c0_i32 = arith.constant 0 : i32
    %c0_i32_0 = arith.constant 0 : i32
    %c0_i32_1 = arith.constant 0 : i32
    return %c0_i32, %c0_i32_0 : i32, i32
  }
  func.func @transform_11(%arg0: i32) -> (i32, i32) {
    %c0_i32 = arith.constant 0 : i32
    %c0_i32_0 = arith.constant 0 : i32
    %c0_i32_1 = arith.constant 0 : i32
    return %c0_i32, %c0_i32_0 : i32, i32
  }
  func.func @transform_12(%arg0: i32) -> (i32, i32, i32) {
    %c0_i32 = arith.constant 0 : i32
    %c0_i32_0 = arith.constant 0 : i32
    %c0_i32_1 = arith.constant 0 : i32
    return %c0_i32, %arg0, %c0_i32_0 : i32, i32, i32
  }
  func.func @transform_13(%arg0: i32) -> (i32, i32) {
    %c0_i32 = arith.constant 0 : i32
    %c0_i32_0 = arith.constant 0 : i32
    %c0_i32_1 = arith.constant 0 : i32
    return %c0_i32, %c0_i32_0 : i32, i32
  }
}

</mosaic_0001>

<llo_original>
// kernel: tpu_custom_call.1
$region0: #{tpu_custom_call.1}
  #allocation0 [shape = 'u32[]', space=smem, size = 0x4, offset = 0x4, fixed_abs, tag = 'smem constant byte address 0x4 - core index']
  #allocation1 [shape = 'u32[72,128]{1,0:T(1,128)}', space=vmem, size = 0x9000, scoped, tag = 'internal scratch']
  %s0 = inlined_call_operand.hbm [shape: f32[2,16,16], index: 0, kind: input, shape index: {}]
  %s1 = inlined_call_operand.vmem [shape: f32[2,32], index: 1, kind: input, shape index: {}]
  %s2 = inlined_call_operand.hbm [shape: f32[16,64], index: 2, kind: input, shape index: {}]
  %s3 = inlined_call_operand.vmem [shape: f32[1,64], index: 3, kind: input, shape index: {}]
  %s4 = inlined_call_operand.vmem [shape: f32[64,96], index: 4, kind: input, shape index: {}]
  %s5 = inlined_call_operand.vmem [shape: f32[1,96], index: 5, kind: input, shape index: {}]
  %s6 = inlined_call_operand.hbm [shape: f32[32,96], index: 6, kind: input, shape index: {}]
  %s7 = inlined_call_operand.vmem [shape: f32[1,32], index: 7, kind: input, shape index: {}]
  %s8 = inlined_call_operand.hbm [shape: f32[32,64], index: 8, kind: input, shape index: {}]
  %s9 = inlined_call_operand.vmem [shape: f32[1,64], index: 9, kind: input, shape index: {}]
  %s10 = inlined_call_operand.vmem [shape: f32[64,7], index: 10, kind: input, shape index: {}]
  %s11 = inlined_call_operand.vmem [shape: f32[1,7], index: 11, kind: input, shape index: {}]
  %s12 = inlined_call_operand.vmem [shape: f32[2,16,6], index: 12, kind: output, shape index: {0}]
  %s13 = inlined_call_operand.hbm [shape: f32[2,32], index: 13, kind: output, shape index: {1}]
  %14 = xla_tuple %s12, %s13
  %s15 = sld [smem:[#allocation0]]
  $region143: #{tpu_custom_call.1} parent=0
    _
  %s17 = ssub.s32 1, %s15
  %s18 = scalar_select 0, %s17, %s15
  $region1: #{tpu_custom_call.1} parent=0
    #allocation2 [shape = 'u8[16384]{0}', space=vmem, size = 0x4000, scoped, tag = 'input window, operand 0']
    #allocation3 [shape = 's32[2]{0}', space=sflag, size = 0x8, scoped, tag = 'scoped memory for tpu_custom_call.1']
    #allocation4 [shape = 's32[2]{0}', space=sflag, size = 0x8, scoped, tag = 'scoped memory for tpu_custom_call.1']
    #allocation5 [shape = 'u8[8192]{0}', space=vmem, size = 0x2000, scoped, tag = 'input window, operand 2, single buffered']
    #allocation6 [shape = 's32[1]{0}', space=sflag, size = 0x4, scoped, tag = 'scoped memory for tpu_custom_call.1']
    #allocation7 [shape = 'u8[16384]{0}', space=vmem, size = 0x4000, scoped, tag = 'input window, operand 6, single buffered']
    #allocation8 [shape = 'u8[16384]{0}', space=vmem, size = 0x4000, scoped, tag = 'input window, operand 8, single buffered']
    #allocation9 [shape = 's32[1]{0}', space=sflag, size = 0x4, scoped, tag = 'scoped memory for tpu_custom_call.1']
    #allocation10 [shape = 'u8[16384]{0}', space=vmem, size = 0x4000, scoped, tag = 'output window, operand 0']
    #allocation11 [shape = 'u8[1024]{0}', space=vmem, size = 0x400, scoped, tag = 'output window, operand 1, single buffered']
    %19 = vsyncpa [#allocation3], 0
    %s20 = scalar_lea.sflag [#allocation3], 1
    %21 = vsyncpa %s20, 0
    %22 = vsyncpa [#allocation6], 0
    %23 = vsyncpa [#allocation9], 0
    %24 = vsyncpa [#allocation4], 0
    loop: start=0, step=1, limit=4
    $region2: #{tpu_custom_call.1} parent=1 // loop_pre_header
      _
    $region3: #{tpu_custom_call.1} parent=1 // loop_header
      %s26 = sphi 0, %s30
      %p27 = scmp.ge.s32.totalorder %s26, 4
      %s36 = sphi 0, %s38
      %s39 = sphi 0, %s36
      %s40 = sphi 0, %s39
      %s56 = sphi 0, %s40
      %s60 = sphi 0, %s60
      %s62 = sphi 0, %s60
      %s63 = sphi 0, %s62
      %s77 = sphi 0, %s63
      %s81 = sphi 0, %s81
      %s83 = sphi 0, %s81
      %s84 = sphi 0, %s83
      %s98 = sphi 0, %s84
      %s102 = sphi 0, %s102
      %s104 = sphi 0, %s102
      %s105 = sphi 0, %s104
      %s119 = sphi 0, %s105
      %s123 = sphi 0, %s123
      %s125 = sphi 0, %s123
      %s126 = sphi 0, %s125
      %s140 = sphi 0, %s126
      %s144 = sphi 0, %s144
      %s146 = sphi 0, %s144
      %s147 = sphi 0, %s146
      %s161 = sphi 0, %s147
      %s165 = sphi 0, %s165
      %s167 = sphi 0, %s165
      %s168 = sphi 0, %s167
      %s182 = sphi 0, %s168
      %s186 = sphi 0, %s186
      %s188 = sphi 0, %s186
      %s189 = sphi 0, %s188
      %s203 = sphi 0, %s189
      %s207 = sphi 0, %s207
      %s209 = sphi 0, %s207
      %s210 = sphi 0, %s209
      %s224 = sphi 0, %s210
      %s228 = sphi 0, %s228
      %s230 = sphi 0, %s228
      %s231 = sphi 0, %s230
      %s245 = sphi 0, %s231
      %s249 = sphi 0, %s249
      %s251 = sphi 0, %s249
      %s252 = sphi 0, %s251
      %s266 = sphi 0, %s252
      %s270 = sphi 0, %s270
      %s272 = sphi 0, %s270
      %s273 = sphi 0, %s272
      %s287 = sphi 0, %s273
      %s293 = sphi 0, %s295
      %s296 = sphi 0, %s293
      %s297 = sphi 0, %s296
      %s313 = sphi 0, %s297
      %s317 = sphi 0, %s317
      %s319 = sphi 0, %s317
      %s320 = sphi 0, %s319
      %s334 = sphi 0, %s320
    $region4: #{tpu_custom_call.1} parent=1 // loop_header_branch
      %29 = sbr.rel (%p27) target = $region8
    $region5: #{tpu_custom_call.1} parent=1 // loop_body
      %s31 = ssub.s32 %s26, 1
      %s32 = ssub.s32 %s26, 2
      %s33 = sadd.s32 %s26, 1
      %s34 = ssub.s32 %s26, %s33
      %p35 = scmp.eq.s32.totalorder %s34, 0
      %s37 = sadd.s32 %s36, 1
      %s38 = scalar_select %p35, %s36, %s37
      %p41 = pneg %p35
      %p42 = scmp.eq.s32.totalorder %s26, 1
      %p43 = por %p41, %p42
      %p44 = scmp.ne.s32.totalorder %s36, %s39
      %p45 = scmp.eq.s32.totalorder %s26, 0
      %p46 = por %p44, %p45
      %p47 = scmp.ne.s32.totalorder %s36, %s39
      %p48 = scmp.eq.s32.totalorder %s31, 1
      %p49 = por %p47, %p48
      %p50 = scmp.ne.s32.totalorder %s39, %s40
      %p51 = scmp.eq.s32.totalorder %s31, 0
      %p52 = por %p50, %p51
      %p53 = scmp.ne.s32.totalorder %s39, %s40
      %p54 = scmp.eq.s32.totalorder %s32, 1
      %p55 = por %p53, %p54
      %p57 = scmp.ne.s32.totalorder %s40, %s56
      %p58 = scmp.eq.s32.totalorder %s32, 0
      %p59 = por %p57, %p58
      %s61 = sadd.s32 %s60, 1
      %p64 = scmp.eq.s32.totalorder %s26, 1
      %p65 = scmp.ne.s32.totalorder %s60, %s62
      %p66 = scmp.eq.s32.totalorder %s26, 0
      %p67 = por %p65, %p66
      %p68 = scmp.ne.s32.totalorder %s60, %s62
      %p69 = scmp.eq.s32.totalorder %s31, 1
      %p70 = por %p68, %p69
      %p71 = scmp.ne.s32.totalorder %s62, %s63
      %p72 = scmp.eq.s32.totalorder %s31, 0
      %p73 = por %p71, %p72
      %p74 = scmp.ne.s32.totalorder %s62, %s63
      %p75 = scmp.eq.s32.totalorder %s32, 1
      %p76 = por %p74, %p75
      %p78 = scmp.ne.s32.totalorder %s63, %s77
      %p79 = scmp.eq.s32.totalorder %s32, 0
      %p80 = por %p78, %p79
      %s82 = sadd.s32 %s81, 1
      %p85 = scmp.eq.s32.totalorder %s26, 1
      %p86 = scmp.ne.s32.totalorder %s81, %s83
      %p87 = scmp.eq.s32.totalorder %s26, 0
      %p88 = por %p86, %p87
      %p89 = scmp.ne.s32.totalorder %s81, %s83
      %p90 = scmp.eq.s32.totalorder %s31, 1
      %p91 = por %p89, %p90
      %p92 = scmp.ne.s32.totalorder %s83, %s84
      %p93 = scmp.eq.s32.totalorder %s31, 0
      %p94 = por %p92, %p93
      %p95 = scmp.ne.s32.totalorder %s83, %s84
      %p96 = scmp.eq.s32.totalorder %s32, 1
      %p97 = por %p95, %p96
      %p99 = scmp.ne.s32.totalorder %s84, %s98
      %p100 = scmp.eq.s32.totalorder %s32, 0
      %p101 = por %p99, %p100
      %s103 = sadd.s32 %s102, 1
      %p106 = scmp.eq.s32.totalorder %s26, 1
      %p107 = scmp.ne.s32.totalorder %s102, %s104
      %p108 = scmp.eq.s32.totalorder %s26, 0
      %p109 = por %p107, %p108
      %p110 = scmp.ne.s32.totalorder %s102, %s104
      %p111 = scmp.eq.s32.totalorder %s31, 1
      %p112 = por %p110, %p111
      %p113 = scmp.ne.s32.totalorder %s104, %s105
      %p114 = scmp.eq.s32.totalorder %s31, 0
      %p115 = por %p113, %p114
      %p116 = scmp.ne.s32.totalorder %s104, %s105
      %p117 = scmp.eq.s32.totalorder %s32, 1
      %p118 = por %p116, %p117
      %p120 = scmp.ne.s32.totalorder %s105, %s119
      %p121 = scmp.eq.s32.totalorder %s32, 0
      %p122 = por %p120, %p121
      %s124 = sadd.s32 %s123, 1
      %p127 = scmp.eq.s32.totalorder %s26, 1
      %p128 = scmp.ne.s32.totalorder %s123, %s125
      %p129 = scmp.eq.s32.totalorder %s26, 0
      %p130 = por %p128, %p129
      %p131 = scmp.ne.s32.totalorder %s123, %s125
      %p132 = scmp.eq.s32.totalorder %s31, 1
      %p133 = por %p131, %p132
      %p134 = scmp.ne.s32.totalorder %s125, %s126
      %p135 = scmp.eq.s32.totalorder %s31, 0
      %p136 = por %p134, %p135
      %p137 = scmp.ne.s32.totalorder %s125, %s126
      %p138 = scmp.eq.s32.totalorder %s32, 1
      %p139 = por %p137, %p138
      %p141 = scmp.ne.s32.totalorder %s126, %s140
      %p142 = scmp.eq.s32.totalorder %s32, 0
      %p143 = por %p141, %p142
      %s145 = sadd.s32 %s144, 1
      %p148 = scmp.eq.s32.totalorder %s26, 1
      %p149 = scmp.ne.s32.totalorder %s144, %s146
      %p150 = scmp.eq.s32.totalorder %s26, 0
      %p151 = por %p149, %p150
      %p152 = scmp.ne.s32.totalorder %s144, %s146
      %p153 = scmp.eq.s32.totalorder %s31, 1
      %p154 = por %p152, %p153
      %p155 = scmp.ne.s32.totalorder %s146, %s147
      %p156 = scmp.eq.s32.totalorder %s31, 0
      %p157 = por %p155, %p156
      %p158 = scmp.ne.s32.totalorder %s146, %s147
      %p159 = scmp.eq.s32.totalorder %s32, 1
      %p160 = por %p158, %p159
      %p162 = scmp.ne.s32.totalorder %s147, %s161
      %p163 = scmp.eq.s32.totalorder %s32, 0
      %p164 = por %p162, %p163
      %s166 = sadd.s32 %s165, 1
      %p169 = scmp.eq.s32.totalorder %s26, 1
      %p170 = scmp.ne.s32.totalorder %s165, %s167
      %p171 = scmp.eq.s32.totalorder %s26, 0
      %p172 = por %p170, %p171
      %p173 = scmp.ne.s32.totalorder %s165, %s167
      %p174 = scmp.eq.s32.totalorder %s31, 1
      %p175 = por %p173, %p174
      %p176 = scmp.ne.s32.totalorder %s167, %s168
      %p177 = scmp.eq.s32.totalorder %s31, 0
      %p178 = por %p176, %p177
      %p179 = scmp.ne.s32.totalorder %s167, %s168
      %p180 = scmp.eq.s32.totalorder %s32, 1
      %p181 = por %p179, %p180
      %p183 = scmp.ne.s32.totalorder %s168, %s182
      %p184 = scmp.eq.s32.totalorder %s32, 0
      %p185 = por %p183, %p184
      %s187 = sadd.s32 %s186, 1
      %p190 = scmp.eq.s32.totalorder %s26, 1
      %p191 = scmp.ne.s32.totalorder %s186, %s188
      %p192 = scmp.eq.s32.totalorder %s26, 0
      %p193 = por %p191, %p192
      %p194 = scmp.ne.s32.totalorder %s186, %s188
      %p195 = scmp.eq.s32.totalorder %s31, 1
      %p196 = por %p194, %p195
      %p197 = scmp.ne.s32.totalorder %s188, %s189
      %p198 = scmp.eq.s32.totalorder %s31, 0
      %p199 = por %p197, %p198
      %p200 = scmp.ne.s32.totalorder %s188, %s189
      %p201 = scmp.eq.s32.totalorder %s32, 1
      %p202 = por %p200, %p201
      %p204 = scmp.ne.s32.totalorder %s189, %s203
      %p205 = scmp.eq.s32.totalorder %s32, 0
      %p206 = por %p204, %p205
      %s208 = sadd.s32 %s207, 1
      %p211 = scmp.eq.s32.totalorder %s26, 1
      %p212 = scmp.ne.s32.totalorder %s207, %s209
      %p213 = scmp.eq.s32.totalorder %s26, 0
      %p214 = por %p212, %p213
      %p215 = scmp.ne.s32.totalorder %s207, %s209
      %p216 = scmp.eq.s32.totalorder %s31, 1
      %p217 = por %p215, %p216
      %p218 = scmp.ne.s32.totalorder %s209, %s210
      %p219 = scmp.eq.s32.totalorder %s31, 0
      %p220 = por %p218, %p219
      %p221 = scmp.ne.s32.totalorder %s209, %s210
      %p222 = scmp.eq.s32.totalorder %s32, 1
      %p223 = por %p221, %p222
      %p225 = scmp.ne.s32.totalorder %s210, %s224
      %p226 = scmp.eq.s32.totalorder %s32, 0
      %p227 = por %p225, %p226
      %s229 = sadd.s32 %s228, 1
      %p232 = scmp.eq.s32.totalorder %s26, 1
      %p233 = scmp.ne.s32.totalorder %s228, %s230
      %p234 = scmp.eq.s32.totalorder %s26, 0
      %p235 = por %p233, %p234
      %p236 = scmp.ne.s32.totalorder %s228, %s230
      %p237 = scmp.eq.s32.totalorder %s31, 1
      %p238 = por %p236, %p237
      %p239 = scmp.ne.s32.totalorder %s230, %s231
      %p240 = scmp.eq.s32.totalorder %s31, 0
      %p241 = por %p239, %p240
      %p242 = scmp.ne.s32.totalorder %s230, %s231
      %p243 = scmp.eq.s32.totalorder %s32, 1
      %p244 = por %p242, %p243
      %p246 = scmp.ne.s32.totalorder %s231, %s245
      %p247 = scmp.eq.s32.totalorder %s32, 0
      %p248 = por %p246, %p247
      %s250 = sadd.s32 %s249, 1
      %p253 = scmp.eq.s32.totalorder %s26, 1
      %p254 = scmp.ne.s32.totalorder %s249, %s251
      %p255 = scmp.eq.s32.totalorder %s26, 0
      %p256 = por %p254, %p255
      %p257 = scmp.ne.s32.totalorder %s249, %s251
      %p258 = scmp.eq.s32.totalorder %s31, 1
      %p259 = por %p257, %p258
      %p260 = scmp.ne.s32.totalorder %s251, %s252
      %p261 = scmp.eq.s32.totalorder %s31, 0
      %p262 = por %p260, %p261
      %p263 = scmp.ne.s32.totalorder %s251, %s252
      %p264 = scmp.eq.s32.totalorder %s32, 1
      %p265 = por %p263, %p264
      %p267 = scmp.ne.s32.totalorder %s252, %s266
      %p268 = scmp.eq.s32.totalorder %s32, 0
      %p269 = por %p267, %p268
      %s271 = sadd.s32 %s270, 1
      %p274 = scmp.eq.s32.totalorder %s26, 1
      %p275 = scmp.ne.s32.totalorder %s270, %s272
      %p276 = scmp.eq.s32.totalorder %s26, 0
      %p277 = por %p275, %p276
      %p278 = scmp.ne.s32.totalorder %s270, %s272
      %p279 = scmp.eq.s32.totalorder %s31, 1
      %p280 = por %p278, %p279
      %p281 = scmp.ne.s32.totalorder %s272, %s273
      %p282 = scmp.eq.s32.totalorder %s31, 0
      %p283 = por %p281, %p282
      %p284 = scmp.ne.s32.totalorder %s272, %s273
      %p285 = scmp.eq.s32.totalorder %s32, 1
      %p286 = por %p284, %p285
      %p288 = scmp.ne.s32.totalorder %s273, %s287
      %p289 = scmp.eq.s32.totalorder %s32, 0
      %p290 = por %p288, %p289
      %s291 = ssub.s32 %s26, %s33
      %p292 = scmp.eq.s32.totalorder %s291, 0
      %s294 = sadd.s32 %s293, 1
      %s295 = scalar_select %p292, %s293, %s294
      %p298 = pneg %p292
      %p299 = scmp.eq.s32.totalorder %s26, 1
      %p300 = por %p298, %p299
      %p301 = scmp.ne.s32.totalorder %s293, %s296
      %p302 = scmp.eq.s32.totalorder %s26, 0
      %p303 = por %p301, %p302
      %p304 = scmp.ne.s32.totalorder %s293, %s296
      %p305 = scmp.eq.s32.totalorder %s31, 1
      %p306 = por %p304, %p305
      %p307 = scmp.ne.s32.totalorder %s296, %s297
      %p308 = scmp.eq.s32.totalorder %s31, 0
      %p309 = por %p307, %p308
      %p310 = scmp.ne.s32.totalorder %s296, %s297
      %p311 = scmp.eq.s32.totalorder %s32, 1
      %p312 = por %p310, %p311
      %p314 = scmp.ne.s32.totalorder %s297, %s313
      %p315 = scmp.eq.s32.totalorder %s32, 0
      %p316 = por %p314, %p315
      %s318 = sadd.s32 %s317, 1
      %p321 = scmp.eq.s32.totalorder %s26, 1
      %p322 = scmp.ne.s32.totalorder %s317, %s319
      %p323 = scmp.eq.s32.totalorder %s26, 0
      %p324 = por %p322, %p323
      %p325 = scmp.ne.s32.totalorder %s317, %s319
      %p326 = scmp.eq.s32.totalorder %s31, 1
      %p327 = por %p325, %p326
      %p328 = scmp.ne.s32.totalorder %s319, %s320
      %p329 = scmp.eq.s32.totalorder %s31, 0
      %p330 = por %p328, %p329
      %p331 = scmp.ne.s32.totalorder %s319, %s320
      %p332 = scmp.eq.s32.totalorder %s32, 1
      %p333 = por %p331, %p332
      %p335 = scmp.ne.s32.totalorder %s320, %s334
      %p336 = scmp.eq.s32.totalorder %s32, 0
      %p337 = por %p335, %p336
      %p338 = scmp.le.s32.totalorder 1, %s26
      %p339 = scmp.lt.s32.totalorder %s26, 3
      %p340 = pnand %p338, %p339
      %p341 = pneg %p340
      // Predicated region
      $region9: #{tpu_custom_call.1} parent=5 // pred_check
        _
      $region10: #{tpu_custom_call.1} parent=5 // pred_check_branch
        %343 = sbr.rel (%p340) target = $region12
      $region11: #{tpu_custom_call.1} parent=5 // pred_region
        %s344 = ssub.s32 %s26, 1
        // Predicated region
        $region13: #{tpu_custom_call.1} parent=11 // pred_check
          %p345 = pneg %p73
        $region14: #{tpu_custom_call.1} parent=11 // pred_check_branch
          %347 = sbr.rel (%p345) target = $region16
        $region15: #{tpu_custom_call.1} parent=11 // pred_region
          _
        $region16: #{tpu_custom_call.1} parent=11 // pred_fallthru
          _
        // Predicated region
        $region17: #{tpu_custom_call.1} parent=11 // pred_check
          %p348 = pneg %p94
        $region18: #{tpu_custom_call.1} parent=11 // pred_check_branch
          %350 = sbr.rel (%p348) target = $region20
        $region19: #{tpu_custom_call.1} parent=11 // pred_region
          %352 = vsyncadd [#allocation6], 0
          %s353 = sshll.u32 %s2, 4
          %s354 = int_to_ptr.hbm [resolvable:$true] %s353
          %s355 = sshll.u32 [#allocation5], 4
          %s356 = int_to_ptr.vmem [resolvable:$true] %s355
          %361 = dma.hbm_to_vmem [thread:$0]  %s354, 256, %s356, [#allocation6], 128, 128, 8
        $region20: #{tpu_custom_call.1} parent=11 // pred_fallthru
          _
        // Predicated region
        $region21: #{tpu_custom_call.1} parent=11 // pred_check
          %p362 = pneg %p115
        $region22: #{tpu_custom_call.1} parent=11 // pred_check_branch
          %364 = sbr.rel (%p362) target = $region24
        $region23: #{tpu_custom_call.1} parent=11 // pred_region
          _
        $region24: #{tpu_custom_call.1} parent=11 // pred_fallthru
          _
        // Predicated region
        $region25: #{tpu_custom_call.1} parent=11 // pred_check
          %p365 = pneg %p136
        $region26: #{tpu_custom_call.1} parent=11 // pred_check_branch
          %367 = sbr.rel (%p365) target = $region28
        $region27: #{tpu_custom_call.1} parent=11 // pred_region
          _
        $region28: #{tpu_custom_call.1} parent=11 // pred_fallthru
          _
        // Predicated region
        $region29: #{tpu_custom_call.1} parent=11 // pred_check
          %p368 = pneg %p157
        $region30: #{tpu_custom_call.1} parent=11 // pred_check_branch
          %370 = sbr.rel (%p368) target = $region32
        $region31: #{tpu_custom_call.1} parent=11 // pred_region
          _
        $region32: #{tpu_custom_call.1} parent=11 // pred_fallthru
          _
        // Predicated region
        $region33: #{tpu_custom_call.1} parent=11 // pred_check
          %p371 = pneg %p178
        $region34: #{tpu_custom_call.1} parent=11 // pred_check_branch
          %373 = sbr.rel (%p371) target = $region36
        $region35: #{tpu_custom_call.1} parent=11 // pred_region
          %375 = vsyncadd [#allocation6], 0
          %s376 = sshll.u32 %s6, 4
          %s377 = int_to_ptr.hbm [resolvable:$true] %s376
          %s378 = sshll.u32 [#allocation7], 4
          %s379 = int_to_ptr.vmem [resolvable:$true] %s378
          %384 = dma.hbm_to_vmem [thread:$0]  %s377, 512, %s379, [#allocation6], 128, 128, 8
        $region36: #{tpu_custom_call.1} parent=11 // pred_fallthru
          _
        // Predicated region
        $region37: #{tpu_custom_call.1} parent=11 // pred_check
          %p385 = pneg %p199
        $region38: #{tpu_custom_call.1} parent=11 // pred_check_branch
          %387 = sbr.rel (%p385) target = $region40
        $region39: #{tpu_custom_call.1} parent=11 // pred_region
          _
        $region40: #{tpu_custom_call.1} parent=11 // pred_fallthru
          _
        // Predicated region
        $region41: #{tpu_custom_call.1} parent=11 // pred_check
          %p388 = pneg %p220
        $region42: #{tpu_custom_call.1} parent=11 // pred_check_branch
          %390 = sbr.rel (%p388) target = $region44
        $region43: #{tpu_custom_call.1} parent=11 // pred_region
          %392 = vsyncadd [#allocation9], 0
          %s393 = sshll.u32 %s8, 4
          %s394 = int_to_ptr.hbm [resolvable:$true] %s393
          %s395 = sshll.u32 [#allocation8], 4
          %s396 = int_to_ptr.vmem [resolvable:$true] %s395
          %401 = dma.hbm_to_vmem [thread:$0]  %s394, 512, %s396, [#allocation9], 128, 128, 8
        $region44: #{tpu_custom_call.1} parent=11 // pred_fallthru
          _
        // Predicated region
        $region45: #{tpu_custom_call.1} parent=11 // pred_check
          %p402 = pneg %p241
        $region46: #{tpu_custom_call.1} parent=11 // pred_check_branch
          %404 = sbr.rel (%p402) target = $region48
        $region47: #{tpu_custom_call.1} parent=11 // pred_region
          _
        $region48: #{tpu_custom_call.1} parent=11 // pred_fallthru
          _
        // Predicated region
        $region49: #{tpu_custom_call.1} parent=11 // pred_check
          %p405 = pneg %p262
        $region50: #{tpu_custom_call.1} parent=11 // pred_check_branch
          %407 = sbr.rel (%p405) target = $region52
        $region51: #{tpu_custom_call.1} parent=11 // pred_region
          _
        $region52: #{tpu_custom_call.1} parent=11 // pred_fallthru
          _
        // Predicated region
        $region53: #{tpu_custom_call.1} parent=11 // pred_check
          %p408 = pneg %p283
        $region54: #{tpu_custom_call.1} parent=11 // pred_check_branch
          %410 = sbr.rel (%p408) target = $region56
        $region55: #{tpu_custom_call.1} parent=11 // pred_region
          _
        $region56: #{tpu_custom_call.1} parent=11 // pred_fallthru
          _
      $region12: #{tpu_custom_call.1} parent=5 // pred_fallthru
        _
      %p411 = scmp.lt.s32.totalorder %s26, 2
      // Predicated region
      $region57: #{tpu_custom_call.1} parent=5 // pred_check
        %p412 = pneg %p411
      $region58: #{tpu_custom_call.1} parent=5 // pred_check_branch
        %414 = sbr.rel (%p412) target = $region60
      $region59: #{tpu_custom_call.1} parent=5 // pred_region
        // Predicated region
        $region61: #{tpu_custom_call.1} parent=59 // pred_check
          %p415 = pneg %p46
        $region62: #{tpu_custom_call.1} parent=59 // pred_check_branch
          %417 = sbr.rel (%p415) target = $region64
        $region63: #{tpu_custom_call.1} parent=59 // pred_region
          %s418 = sand.u32 %s36, 1
          %s419 = scalar_lea.sflag [#allocation3], %s418
          %s420 = sand.u32 %s36, 1
          %s421 = smul.addr %s420, 16
          %s422 = scalar_lea.vmem [#allocation2], %s421
          %424 = vsyncadd %s419, 0
          %s425 = smul.addr %s26, 8
          %s426 = scalar_lea.hbm %s0, %s425
          %s427 = sshll.u32 %s426, 4
          %s428 = int_to_ptr.hbm [resolvable:$true] %s427
          %s429 = sshll.u32 %s422, 4
          %s430 = int_to_ptr.vmem [resolvable:$true] %s429
          %435 = dma.hbm_to_vmem [thread:$0]  %s428, 256, %s430, %s419, 256, 128, 8
        $region64: #{tpu_custom_call.1} parent=59 // pred_fallthru
          _
      $region60: #{tpu_custom_call.1} parent=5 // pred_fallthru
        _
      %p436 = scmp.le.s32.totalorder 1, %s26
      %p437 = scmp.lt.s32.totalorder %s26, 3
      %p438 = pnand %p436, %p437
      %p439 = pneg %p438
      // Predicated region
      $region65: #{tpu_custom_call.1} parent=5 // pred_check
        _
      $region66: #{tpu_custom_call.1} parent=5 // pred_check_branch
        %441 = sbr.rel (%p438) target = $region68
      $region67: #{tpu_custom_call.1} parent=5 // pred_region
        %s442 = ssub.s32 %s26, 1
        %s443 = sand.u32 %s39, 1
        %s444 = scalar_lea.sflag [#allocation3], %s443
        %s445 = sand.u32 %s39, 1
        %s446 = smul.addr %s445, 16
        %s447 = scalar_lea.vmem [#allocation2], %s446
        // Predicated region
        $region69: #{tpu_custom_call.1} parent=67 // pred_check
          %p448 = pneg %p52
        $region70: #{tpu_custom_call.1} parent=67 // pred_check_branch
          %450 = sbr.rel (%p448) target = $region72
        $region71: #{tpu_custom_call.1} parent=67 // pred_region
          %452 = dma.done %s444, 256
        $region72: #{tpu_custom_call.1} parent=67 // pred_fallthru
          _
        // Predicated region
        $region73: #{tpu_custom_call.1} parent=67 // pred_check
          %p453 = pneg %p94
        $region74: #{tpu_custom_call.1} parent=67 // pred_check_branch
          %455 = sbr.rel (%p453) target = $region76
        $region75: #{tpu_custom_call.1} parent=67 // pred_region
          %457 = dma.done [#allocation6], 256
        $region76: #{tpu_custom_call.1} parent=67 // pred_fallthru
          _
        // Predicated region
        $region77: #{tpu_custom_call.1} parent=67 // pred_check
          %p458 = pneg %p178
        $region78: #{tpu_custom_call.1} parent=67 // pred_check_branch
          %460 = sbr.rel (%p458) target = $region80
        $region79: #{tpu_custom_call.1} parent=67 // pred_region
          %462 = dma.done [#allocation6], 512
        $region80: #{tpu_custom_call.1} parent=67 // pred_fallthru
          _
        // Predicated region
        $region81: #{tpu_custom_call.1} parent=67 // pred_check
          %p463 = pneg %p220
        $region82: #{tpu_custom_call.1} parent=67 // pred_check_branch
          %465 = sbr.rel (%p463) target = $region84
        $region83: #{tpu_custom_call.1} parent=67 // pred_region
          %467 = dma.done [#allocation9], 512
        $region84: #{tpu_custom_call.1} parent=67 // pred_fallthru
          _
        %s468 = sand.u32 %s39, 1
        %s469 = scalar_lea.sflag [#allocation3], %s468
        %s470 = sand.u32 %s39, 1
        %s471 = smul.addr %s470, 16
        %s472 = scalar_lea.vmem [#allocation2], %s471
        %p473 = pneg %p52
        %p474 = pneg %p49
        %p475 = pneg %p73
        %p476 = pneg %p70
        %p477 = pneg %p94
        %p478 = pneg %p91
        %p479 = pneg %p115
        %p480 = pneg %p112
        %p481 = pneg %p136
        %p482 = pneg %p133
        %p483 = pneg %p157
        %p484 = pneg %p154
        %p485 = pneg %p178
        %p486 = pneg %p175
        %p487 = pneg %p199
        %p488 = pneg %p196
        %p489 = pneg %p220
        %p490 = pneg %p217
        %p491 = pneg %p241
        %p492 = pneg %p238
        %p493 = pneg %p262
        %p494 = pneg %p259
        %p495 = pneg %p283
        %p496 = pneg %p280
        %p497 = pneg %p309
        %p498 = pneg %p306
        %s499 = sand.u32 %s296, 1
        %s500 = sand.u32 %s296, 1
        %s501 = smul.addr %s500, 16
        %s502 = scalar_lea.vmem [#allocation10], %s501
        %p503 = pneg %p330
        %p504 = pneg %p327
        %p505 = scmp.eq.s32.totalorder %s31, 0
        // Predicated region
        $region85: #{tpu_custom_call.1} parent=67 // pred_check
          %p506 = pneg %p505
        $region86: #{tpu_custom_call.1} parent=67 // pred_check_branch
          %508 = sbr.rel (%p506) target = $region88
        $region87: #{tpu_custom_call.1} parent=67 // pred_region
          %v509 = vld [vmem:[%s1] sm:$0x3]
          %vm510 = vcmask 254976
          %511 = vst.msk [vmem:[#allocation11] sm:$0x3] %vm510, %v509
        $region88: #{tpu_custom_call.1} parent=67 // pred_fallthru
          _
        %v512 = vld [vmem:[%s447] sm:$0xff]
        %v513 = vld [vmem:[%s447 + $0x8] sm:$0xff]
        %v514 = vld [vmem:[#allocation5] sm:$0xff]
        %v515 = vld [vmem:[#allocation5 + $0x8] sm:$0xff]
        %v516 = vld [vmem:[%s3] sm:$0x1]
        %v518 = vperm.slane %v516, 0
        %vm520 = vcmask 130048
        %v522 = vsel %vm520, %v512, 0
        %v525 = vsel %vm520, %v513, 0
        %527 = vmatpush.msra.mxu0 0.0
        %528 = vmatpush.msra.mxu0 0.0
        %529 = vmatpush.msra.mxu0 0.0
        %530 = vmatpush.msra.mxu0 0.0
        %531 = vmatpush.msra.mxu0 0.0
        %532 = vmatpush.msra.mxu0 0.0
        %533 = vmatpush.msra.mxu0 0.0
        %534 = vmatpush.msra.mxu0 0.0
        %535 = vmatpush.msra.mxu0 0.0
        %536 = vmatpush.msra.mxu0 0.0
        %537 = vmatpush.msra.mxu0 0.0
        %538 = vmatpush.msra.mxu0 0.0
        %539 = vmatpush.msra.mxu0 0.0
        %540 = vmatpush.msra.mxu0 0.0
        %541 = vmatpush.msra.mxu0 %v515
        %542 = vmatpush.msra.mxu0 %v514
        %543 = vmatmul.f32.gmra.mxu0 %v522
        %v544 = vpop.f32.mrf.mxu0
        %v545 = vadd.f32 %v518, %v544
        %546 = vmatmul.f32.gmra.mxu0 %v525
        %v547 = vpop.f32.mrf.mxu0
        %v548 = vadd.f32 %v518, %v547
        %549 = vdwg.mxu0
        %v550 = vmax.f32 %v545, 0.0
        %v551 = vmax.f32 %v548, 0.0
        %v552 = vld [vmem:[%s4] sm:$0xff]
        %v553 = vld [vmem:[%s4 + $0x8] sm:$0xff]
        %v554 = vld [vmem:[%s4 + $0x10] sm:$0xff]
        %v555 = vld [vmem:[%s4 + $0x18] sm:$0xff]
        %v556 = vld [vmem:[%s4 + $0x20] sm:$0xff]
        %v557 = vld [vmem:[%s4 + $0x28] sm:$0xff]
        %v558 = vld [vmem:[%s4 + $0x30] sm:$0xff]
        %v559 = vld [vmem:[%s4 + $0x38] sm:$0xff]
        %v560 = vld [vmem:[%s5] sm:$0x1]
        %v562 = vperm.slane %v560, 0
        %vm564 = vcmask 523264
        %v566 = vsel %vm564, %v550, 0
        %v569 = vsel %vm564, %v551, 0
        %571 = vmatpush.msra.mxu0 0.0
        %572 = vmatpush.msra.mxu0 0.0
        %573 = vmatpush.msra.mxu0 0.0
        %574 = vmatpush.msra.mxu0 0.0
        %575 = vmatpush.msra.mxu0 0.0
        %576 = vmatpush.msra.mxu0 0.0
        %577 = vmatpush.msra.mxu0 0.0
        %578 = vmatpush.msra.mxu0 0.0
        %579 = vmatpush.msra.mxu0 %v559
        %580 = vmatpush.msra.mxu0 %v558
        %581 = vmatpush.msra.mxu0 %v557
        %582 = vmatpush.msra.mxu0 %v556
        %583 = vmatpush.msra.mxu0 %v555
        %584 = vmatpush.msra.mxu0 %v554
        %585 = vmatpush.msra.mxu0 %v553
        %586 = vmatpush.msra.mxu0 %v552
        %587 = vmatmul.f32.gmra.mxu0 %v566
        %v588 = vpop.f32.mrf.mxu0
        %v589 = vadd.f32 %v562, %v588
        %590 = vmatmul.f32.gmra.mxu0 %v569
        %v591 = vpop.f32.mrf.mxu0
        %v592 = vadd.f32 %v562, %v591
        %593 = vdwg.mxu0
        %v594 = vld [vmem:[#allocation7] sm:$0xff]
        %v595 = vld [vmem:[#allocation7 + $0x8] sm:$0xff]
        %v596 = vld [vmem:[#allocation7 + $0x10] sm:$0xff]
        %v597 = vld [vmem:[#allocation7 + $0x18] sm:$0xff]
        %v598 = vld [vmem:[%s7] sm:$0x1]
        %v600 = vperm.slane %v598, 0
        %v601 = vld [vmem:[#allocation11] sm:$0x3]
        %vm602 = vcmask 261120
        %v604 = vsel %vm602, %v601, 0
        %606 = vmatpush.msra.mxu0 0.0
        %607 = vmatpush.msra.mxu0 0.0
        %608 = vmatpush.msra.mxu0 0.0
        %609 = vmatpush.msra.mxu0 0.0
        %610 = vmatpush.msra.mxu0 0.0
        %611 = vmatpush.msra.mxu0 0.0
        %612 = vmatpush.msra.mxu0 0.0
        %613 = vmatpush.msra.mxu0 0.0
        %614 = vmatpush.msra.mxu0 0.0
        %615 = vmatpush.msra.mxu0 0.0
        %616 = vmatpush.msra.mxu0 0.0
        %617 = vmatpush.msra.mxu0 0.0
        %618 = vmatpush.msra.mxu0 %v597
        %619 = vmatpush.msra.mxu0 %v596
        %620 = vmatpush.msra.mxu0 %v595
        %621 = vmatpush.msra.mxu0 %v594
        %622 = vmatmul.f32.gmra.mxu0 %v604
        %v623 = vpop.f32.mrf.mxu0
        %v624 = vadd.f32 0.0, %v623
        %625 = vdwg.mxu0
        %v627 = vrot.slane %v624, 1
        %v630 = vadd.f32 %v589, %v624
        %v631 = vadd.f32 %v592, %v627
        %v632 = vxor.u32 %v630, 2147483648
        %v633 = vxor.u32 %v631, 2147483648
        %v634 = vmul.f32 %v632, 1.442695
        %v635 = vpow.pop %v634
        %v636 = vmul.f32 %v633, 1.442695
        %v637 = vpow.pop %v636
        %v638 = vadd.f32 %v635, 1.0
        %v639 = vadd.f32 %v637, 1.0
        %v640 = vrcp.pop %v638
        %v641 = vmul.f32 %v638, %v640
        %v642 = vsub.f32 1.0, %v641
        %v643 = vmul.f32 %v640, %v642
        %v644 = vadd.f32 %v640, %v643
        %vm645 = vweird.f32 %v638
        %vm646 = vweird.f32 %v640
        %vm647 = vmor %vm645, %vm646
        %v648 = vsel %vm647, %v640, %v644
        %v649 = vand.u32 2147483647, %v638
        %vm650 = vcmp.eq.f32.partialorder %v649, 8.507059e+37
        %v651 = vand.u32 %v638, 2147483648
        %v652 = vor.u32 1.1754944e-38, %v651
        %v653 = vsel %vm650, %v652, %v648
        %v654 = vmul.f32 1.0, %v653
        %v655 = vrcp.pop %v639
        %v656 = vmul.f32 %v639, %v655
        %v657 = vsub.f32 1.0, %v656
        %v658 = vmul.f32 %v655, %v657
        %v659 = vadd.f32 %v655, %v658
        %vm660 = vweird.f32 %v639
        %vm661 = vweird.f32 %v655
        %vm662 = vmor %vm660, %vm661
        %v663 = vsel %vm662, %v655, %v659
        %v664 = vand.u32 2147483647, %v639
        %vm665 = vcmp.eq.f32.partialorder %v664, 8.507059e+37
        %v666 = vand.u32 %v639, 2147483648
        %v667 = vor.u32 1.1754944e-38, %v666
        %v668 = vsel %vm665, %v667, %v663
        %v669 = vmul.f32 1.0, %v668
        %670 = vrot.lane.b32.xlu0 %v600, 64
        %v671 = vpop.permute.xlu0 %670
        %v673 = vadd.f32 %v624, %v671
        %v675 = vrot.slane %v673, 1
        %676 = vrot.lane.b32.xlu0 %v673, 64
        %v677 = vpop.permute.xlu0 %676
        %678 = vrot.lane.b32.xlu0 %v675, 64
        %v679 = vpop.permute.xlu0 %678
        %v682 = vmul.f32 %v654, %v677
        %v683 = vmul.f32 %v669, %v679
        %686 = vrot.lane.b32.xlu0 %v682, 64
        %v687 = vpop.permute.xlu0 %686
        %688 = vrot.lane.b32.xlu0 %v683, 64
        %v689 = vpop.permute.xlu0 %688
        %v692 = vadd.f32 %v589, %v687
        %v693 = vadd.f32 %v592, %v689
        %v694 = vtanh.pop %v692
        %v695 = vtanh.pop %v693
        %v696 = vsub.f32 1.0, %v654
        %v697 = vsub.f32 1.0, %v669
        %700 = vrot.lane.b32.xlu0 %v694, 96
        %v701 = vpop.permute.xlu0 %700
        %702 = vrot.lane.b32.xlu0 %v695, 96
        %v703 = vpop.permute.xlu0 %702
        %v706 = vmul.f32 %v696, %v701
        %v707 = vmul.f32 %v697, %v703
        %v708 = vrot.slane %v601, 1
        %709 = vrot.lane.b32.xlu0 %v601, 32
        %v710 = vpop.permute.xlu0 %709
        %711 = vrot.lane.b32.xlu0 %v708, 32
        %v712 = vpop.permute.xlu0 %711
        %v715 = vmul.f32 %v654, %v710
        %v716 = vmul.f32 %v669, %v712
        %v717 = vadd.f32 %v706, %v715
        %v718 = vadd.f32 %v707, %v716
        %v721 = vrot.slane %v718, 7
        %vm722 = vcmask 1041409
        %v723 = vsel %vm722, %v721, %v717
        %724 = vrot.lane.b32.xlu0 %v723, 96
        %v725 = vpop.permute.xlu0 %724
        %v726 = vsel %vm602, %v725, 0
        %728 = vmatpush.msra.mxu0 0.0
        %729 = vmatpush.msra.mxu0 0.0
        %730 = vmatpush.msra.mxu0 0.0
        %731 = vmatpush.msra.mxu0 0.0
        %732 = vmatpush.msra.mxu0 0.0
        %733 = vmatpush.msra.mxu0 0.0
        %734 = vmatpush.msra.mxu0 0.0
        %735 = vmatpush.msra.mxu0 0.0
        %736 = vmatpush.msra.mxu0 0.0
        %737 = vmatpush.msra.mxu0 0.0
        %738 = vmatpush.msra.mxu0 0.0
        %739 = vmatpush.msra.mxu0 0.0
        %740 = vmatpush.msra.mxu0 %v597
        %741 = vmatpush.msra.mxu0 %v596
        %742 = vmatpush.msra.mxu0 %v595
        %743 = vmatpush.msra.mxu0 %v594
        %744 = vmatmul.f32.gmra.mxu0 %v726
        %v745 = vpop.f32.mrf.mxu0
        %v746 = vadd.f32 0.0, %v745
        %747 = vdwg.mxu0
        %v749 = vrot.slane %v746, 7
        %v752 = vadd.f32 %v589, %v749
        %v753 = vadd.f32 %v592, %v746
        %v754 = vxor.u32 %v752, 2147483648
        %v755 = vxor.u32 %v753, 2147483648
        %v756 = vmul.f32 %v754, 1.442695
        %v757 = vpow.pop %v756
        %v758 = vmul.f32 %v755, 1.442695
        %v759 = vpow.pop %v758
        %v760 = vadd.f32 %v757, 1.0
        %v761 = vadd.f32 %v759, 1.0
        %v762 = vrcp.pop %v760
        %v763 = vmul.f32 %v760, %v762
        %v764 = vsub.f32 1.0, %v763
        %v765 = vmul.f32 %v762, %v764
        %v766 = vadd.f32 %v762, %v765
        %vm767 = vweird.f32 %v760
        %vm768 = vweird.f32 %v762
        %vm769 = vmor %vm767, %vm768
        %v770 = vsel %vm769, %v762, %v766
        %v771 = vand.u32 2147483647, %v760
        %vm772 = vcmp.eq.f32.partialorder %v771, 8.507059e+37
        %v773 = vand.u32 %v760, 2147483648
        %v774 = vor.u32 1.1754944e-38, %v773
        %v775 = vsel %vm772, %v774, %v770
        %v776 = vmul.f32 1.0, %v775
        %v777 = vrcp.pop %v761
        %v778 = vmul.f32 %v761, %v777
        %v779 = vsub.f32 1.0, %v778
        %v780 = vmul.f32 %v777, %v779
        %v781 = vadd.f32 %v777, %v780
        %vm782 = vweird.f32 %v761
        %vm783 = vweird.f32 %v777
        %vm784 = vmor %vm782, %vm783
        %v785 = vsel %vm784, %v777, %v781
        %v786 = vand.u32 2147483647, %v761
        %vm787 = vcmp.eq.f32.partialorder %v786, 8.507059e+37
        %v788 = vand.u32 %v761, 2147483648
        %v789 = vor.u32 1.1754944e-38, %v788
        %v790 = vsel %vm787, %v789, %v785
        %v791 = vmul.f32 1.0, %v790
        %v792 = vadd.f32 %v746, %v671
        %v794 = vrot.slane %v792, 7
        %795 = vrot.lane.b32.xlu0 %v794, 64
        %v796 = vpop.permute.xlu0 %795
        %797 = vrot.lane.b32.xlu0 %v792, 64
        %v798 = vpop.permute.xlu0 %797
        %v801 = vmul.f32 %v776, %v796
        %v802 = vmul.f32 %v791, %v798
        %805 = vrot.lane.b32.xlu0 %v801, 64
        %v806 = vpop.permute.xlu0 %805
        %807 = vrot.lane.b32.xlu0 %v802, 64
        %v808 = vpop.permute.xlu0 %807
        %v811 = vadd.f32 %v589, %v806
        %v812 = vadd.f32 %v592, %v808
        %v813 = vtanh.pop %v811
        %v814 = vtanh.pop %v812
        %v815 = vsub.f32 1.0, %v776
        %v816 = vsub.f32 1.0, %v791
        %819 = vrot.lane.b32.xlu0 %v813, 96
        %v820 = vpop.permute.xlu0 %819
        %821 = vrot.lane.b32.xlu0 %v814, 96
        %v822 = vpop.permute.xlu0 %821
        %v825 = vmul.f32 %v815, %v820
        %v826 = vmul.f32 %v816, %v822
        %v827 = vrot.slane %v717, 7
        %v830 = vmul.f32 %v776, %v827
        %v831 = vmul.f32 %v791, %v721
        %v832 = vadd.f32 %v825, %v830
        %v833 = vadd.f32 %v826, %v831
        %v836 = vrot.slane %v832, 1
        %v837 = vsel %vm722, %v833, %v836
        %838 = vrot.lane.b32.xlu0 %v837, 96
        %v839 = vpop.permute.xlu0 %838
        %v840 = vsel %vm602, %v839, 0
        %842 = vmatpush.msra.mxu0 0.0
        %843 = vmatpush.msra.mxu0 0.0
        %844 = vmatpush.msra.mxu0 0.0
        %845 = vmatpush.msra.mxu0 0.0
        %846 = vmatpush.msra.mxu0 0.0
        %847 = vmatpush.msra.mxu0 0.0
        %848 = vmatpush.msra.mxu0 0.0
        %849 = vmatpush.msra.mxu0 0.0
        %850 = vmatpush.msra.mxu0 0.0
        %851 = vmatpush.msra.mxu0 0.0
        %852 = vmatpush.msra.mxu0 0.0
        %853 = vmatpush.msra.mxu0 0.0
        %854 = vmatpush.msra.mxu0 %v597
        %855 = vmatpush.msra.mxu0 %v596
        %856 = vmatpush.msra.mxu0 %v595
        %857 = vmatpush.msra.mxu0 %v594
        %858 = vmatmul.f32.gmra.mxu0 %v840
        %v859 = vpop.f32.mrf.mxu0
        %v860 = vadd.f32 0.0, %v859
        %861 = vdwg.mxu0
        %v863 = vrot.slane %v860, 6
        %v864 = vrot.slane %v860, 7
        %v867 = vadd.f32 %v589, %v863
        %v868 = vadd.f32 %v592, %v864
        %v869 = vxor.u32 %v867, 2147483648
        %v870 = vxor.u32 %v868, 2147483648
        %v871 = vmul.f32 %v869, 1.442695
        %v872 = vpow.pop %v871
        %v873 = vmul.f32 %v870, 1.442695
        %v874 = vpow.pop %v873
        %v875 = vadd.f32 %v872, 1.0
        %v876 = vadd.f32 %v874, 1.0
        %v877 = vrcp.pop %v875
        %v878 = vmul.f32 %v875, %v877
        %v879 = vsub.f32 1.0, %v878
        %v880 = vmul.f32 %v877, %v879
        %v881 = vadd.f32 %v877, %v880
        %vm882 = vweird.f32 %v875
        %vm883 = vweird.f32 %v877
        %vm884 = vmor %vm882, %vm883
        %v885 = vsel %vm884, %v877, %v881
        %v886 = vand.u32 2147483647, %v875
        %vm887 = vcmp.eq.f32.partialorder %v886, 8.507059e+37
        %v888 = vand.u32 %v875, 2147483648
        %v889 = vor.u32 1.1754944e-38, %v888
        %v890 = vsel %vm887, %v889, %v885
        %v891 = vmul.f32 1.0, %v890
        %v892 = vrcp.pop %v876
        %v893 = vmul.f32 %v876, %v892
        %v894 = vsub.f32 1.0, %v893
        %v895 = vmul.f32 %v892, %v894
        %v896 = vadd.f32 %v892, %v895
        %vm897 = vweird.f32 %v876
        %vm898 = vweird.f32 %v892
        %vm899 = vmor %vm897, %vm898
        %v900 = vsel %vm899, %v892, %v896
        %v901 = vand.u32 2147483647, %v876
        %vm902 = vcmp.eq.f32.partialorder %v901, 8.507059e+37
        %v903 = vand.u32 %v876, 2147483648
        %v904 = vor.u32 1.1754944e-38, %v903
        %v905 = vsel %vm902, %v904, %v900
        %v906 = vmul.f32 1.0, %v905
        %v907 = vadd.f32 %v860, %v671
        %v909 = vrot.slane %v907, 6
        %v910 = vrot.slane %v907, 7
        %911 = vrot.lane.b32.xlu0 %v909, 64
        %v912 = vpop.permute.xlu0 %911
        %913 = vrot.lane.b32.xlu0 %v910, 64
        %v914 = vpop.permute.xlu0 %913
        %v917 = vmul.f32 %v891, %v912
        %v918 = vmul.f32 %v906, %v914
        %921 = vrot.lane.b32.xlu0 %v917, 64
        %v922 = vpop.permute.xlu0 %921
        %923 = vrot.lane.b32.xlu0 %v918, 64
        %v924 = vpop.permute.xlu0 %923
        %v927 = vadd.f32 %v589, %v922
        %v928 = vadd.f32 %v592, %v924
        %v929 = vtanh.pop %v927
        %v930 = vtanh.pop %v928
        %v931 = vsub.f32 1.0, %v891
        %v932 = vsub.f32 1.0, %v906
        %935 = vrot.lane.b32.xlu0 %v929, 96
        %v936 = vpop.permute.xlu0 %935
        %937 = vrot.lane.b32.xlu0 %v930, 96
        %v938 = vpop.permute.xlu0 %937
        %v941 = vmul.f32 %v931, %v936
        %v942 = vmul.f32 %v932, %v938
        %v943 = vrot.slane %v832, 7
        %v944 = vrot.slane %v833, 7
        %v947 = vmul.f32 %v891, %v943
        %v948 = vmul.f32 %v906, %v944
        %v949 = vadd.f32 %v941, %v947
        %v950 = vadd.f32 %v942, %v948
        %v953 = vrot.slane %v949, 2
        %v954 = vrot.slane %v950, 1
        %v955 = vsel %vm722, %v954, %v953
        %956 = vrot.lane.b32.xlu0 %v955, 96
        %v957 = vpop.permute.xlu0 %956
        %v958 = vsel %vm602, %v957, 0
        %960 = vmatpush.msra.mxu0 0.0
        %961 = vmatpush.msra.mxu0 0.0
        %962 = vmatpush.msra.mxu0 0.0
        %963 = vmatpush.msra.mxu0 0.0
        %964 = vmatpush.msra.mxu0 0.0
        %965 = vmatpush.msra.mxu0 0.0
        %966 = vmatpush.msra.mxu0 0.0
        %967 = vmatpush.msra.mxu0 0.0
        %968 = vmatpush.msra.mxu0 0.0
        %969 = vmatpush.msra.mxu0 0.0
        %970 = vmatpush.msra.mxu0 0.0
        %971 = vmatpush.msra.mxu0 0.0
        %972 = vmatpush.msra.mxu0 %v597
        %973 = vmatpush.msra.mxu0 %v596
        %974 = vmatpush.msra.mxu0 %v595
        %975 = vmatpush.msra.mxu0 %v594
        %976 = vmatmul.f32.gmra.mxu0 %v958
        %v977 = vpop.f32.mrf.mxu0
        %v978 = vadd.f32 0.0, %v977
        %979 = vdwg.mxu0
        %v981 = vrot.slane %v978, 5
        %v982 = vrot.slane %v978, 6
        %v985 = vadd.f32 %v589, %v981
        %v986 = vadd.f32 %v592, %v982
        %v987 = vxor.u32 %v985, 2147483648
        %v988 = vxor.u32 %v986, 2147483648
        %v989 = vmul.f32 %v987, 1.442695
        %v990 = vpow.pop %v989
        %v991 = vmul.f32 %v988, 1.442695
        %v992 = vpow.pop %v991
        %v993 = vadd.f32 %v990, 1.0
        %v994 = vadd.f32 %v992, 1.0
        %v995 = vrcp.pop %v993
        %v996 = vmul.f32 %v993, %v995
        %v997 = vsub.f32 1.0, %v996
        %v998 = vmul.f32 %v995, %v997
        %v999 = vadd.f32 %v995, %v998
        %vm1000 = vweird.f32 %v993
        %vm1001 = vweird.f32 %v995
        %vm1002 = vmor %vm1000, %vm1001
        %v1003 = vsel %vm1002, %v995, %v999
        %v1004 = vand.u32 2147483647, %v993
        %vm1005 = vcmp.eq.f32.partialorder %v1004, 8.507059e+37
        %v1006 = vand.u32 %v993, 2147483648
        %v1007 = vor.u32 1.1754944e-38, %v1006
        %v1008 = vsel %vm1005, %v1007, %v1003
        %v1009 = vmul.f32 1.0, %v1008
        %v1010 = vrcp.pop %v994
        %v1011 = vmul.f32 %v994, %v1010
        %v1012 = vsub.f32 1.0, %v1011
        %v1013 = vmul.f32 %v1010, %v1012
        %v1014 = vadd.f32 %v1010, %v1013
        %vm1015 = vweird.f32 %v994
        %vm1016 = vweird.f32 %v1010
        %vm1017 = vmor %vm1015, %vm1016
        %v1018 = vsel %vm1017, %v1010, %v1014
        %v1019 = vand.u32 2147483647, %v994
        %vm1020 = vcmp.eq.f32.partialorder %v1019, 8.507059e+37
        %v1021 = vand.u32 %v994, 2147483648
        %v1022 = vor.u32 1.1754944e-38, %v1021
        %v1023 = vsel %vm1020, %v1022, %v1018
        %v1024 = vmul.f32 1.0, %v1023
        %v1025 = vadd.f32 %v978, %v671
        %v1027 = vrot.slane %v1025, 5
        %v1028 = vrot.slane %v1025, 6
        %1029 = vrot.lane.b32.xlu0 %v1027, 64
        %v1030 = vpop.permute.xlu0 %1029
        %1031 = vrot.lane.b32.xlu0 %v1028, 64
        %v1032 = vpop.permute.xlu0 %1031
        %v1035 = vmul.f32 %v1009, %v1030
        %v1036 = vmul.f32 %v1024, %v1032
        %1039 = vrot.lane.b32.xlu0 %v1035, 64
        %v1040 = vpop.permute.xlu0 %1039
        %1041 = vrot.lane.b32.xlu0 %v1036, 64
        %v1042 = vpop.permute.xlu0 %1041
        %v1045 = vadd.f32 %v589, %v1040
        %v1046 = vadd.f32 %v592, %v1042
        %v1047 = vtanh.pop %v1045
        %v1048 = vtanh.pop %v1046
        %v1049 = vsub.f32 1.0, %v1009
        %v1050 = vsub.f32 1.0, %v1024
        %1053 = vrot.lane.b32.xlu0 %v1047, 96
        %v1054 = vpop.permute.xlu0 %1053
        %1055 = vrot.lane.b32.xlu0 %v1048, 96
        %v1056 = vpop.permute.xlu0 %1055
        %v1059 = vmul.f32 %v1049, %v1054
        %v1060 = vmul.f32 %v1050, %v1056
        %v1061 = vrot.slane %v949, 7
        %v1062 = vrot.slane %v950, 7
        %v1065 = vmul.f32 %v1009, %v1061
        %v1066 = vmul.f32 %v1024, %v1062
        %v1067 = vadd.f32 %v1059, %v1065
        %v1068 = vadd.f32 %v1060, %v1066
        %v1071 = vrot.slane %v1067, 3
        %v1072 = vrot.slane %v1068, 2
        %v1073 = vsel %vm722, %v1072, %v1071
        %1074 = vrot.lane.b32.xlu0 %v1073, 96
        %v1075 = vpop.permute.xlu0 %1074
        %v1076 = vsel %vm602, %v1075, 0
        %1078 = vmatpush.msra.mxu0 0.0
        %1079 = vmatpush.msra.mxu0 0.0
        %1080 = vmatpush.msra.mxu0 0.0
        %1081 = vmatpush.msra.mxu0 0.0
        %1082 = vmatpush.msra.mxu0 0.0
        %1083 = vmatpush.msra.mxu0 0.0
        %1084 = vmatpush.msra.mxu0 0.0
        %1085 = vmatpush.msra.mxu0 0.0
        %1086 = vmatpush.msra.mxu0 0.0
        %1087 = vmatpush.msra.mxu0 0.0
        %1088 = vmatpush.msra.mxu0 0.0
        %1089 = vmatpush.msra.mxu0 0.0
        %1090 = vmatpush.msra.mxu0 %v597
        %1091 = vmatpush.msra.mxu0 %v596
        %1092 = vmatpush.msra.mxu0 %v595
        %1093 = vmatpush.msra.mxu0 %v594
        %1094 = vmatmul.f32.gmra.mxu0 %v1076
        %v1095 = vpop.f32.mrf.mxu0
        %v1096 = vadd.f32 0.0, %v1095
        %1097 = vdwg.mxu0
        %v1099 = vrot.slane %v1096, 4
        %v1100 = vrot.slane %v1096, 5
        %v1103 = vadd.f32 %v589, %v1099
        %v1104 = vadd.f32 %v592, %v1100
        %v1105 = vxor.u32 %v1103, 2147483648
        %v1106 = vxor.u32 %v1104, 2147483648
        %v1107 = vmul.f32 %v1105, 1.442695
        %v1108 = vpow.pop %v1107
        %v1109 = vmul.f32 %v1106, 1.442695
        %v1110 = vpow.pop %v1109
        %v1111 = vadd.f32 %v1108, 1.0
        %v1112 = vadd.f32 %v1110, 1.0
        %v1113 = vrcp.pop %v1111
        %v1114 = vmul.f32 %v1111, %v1113
        %v1115 = vsub.f32 1.0, %v1114
        %v1116 = vmul.f32 %v1113, %v1115
        %v1117 = vadd.f32 %v1113, %v1116
        %vm1118 = vweird.f32 %v1111
        %vm1119 = vweird.f32 %v1113
        %vm1120 = vmor %vm1118, %vm1119
        %v1121 = vsel %vm1120, %v1113, %v1117
        %v1122 = vand.u32 2147483647, %v1111
        %vm1123 = vcmp.eq.f32.partialorder %v1122, 8.507059e+37
        %v1124 = vand.u32 %v1111, 2147483648
        %v1125 = vor.u32 1.1754944e-38, %v1124
        %v1126 = vsel %vm1123, %v1125, %v1121
        %v1127 = vmul.f32 1.0, %v1126
        %v1128 = vrcp.pop %v1112
        %v1129 = vmul.f32 %v1112, %v1128
        %v1130 = vsub.f32 1.0, %v1129
        %v1131 = vmul.f32 %v1128, %v1130
        %v1132 = vadd.f32 %v1128, %v1131
        %vm1133 = vweird.f32 %v1112
        %vm1134 = vweird.f32 %v1128
        %vm1135 = vmor %vm1133, %vm1134
        %v1136 = vsel %vm1135, %v1128, %v1132
        %v1137 = vand.u32 2147483647, %v1112
        %vm1138 = vcmp.eq.f32.partialorder %v1137, 8.507059e+37
        %v1139 = vand.u32 %v1112, 2147483648
        %v1140 = vor.u32 1.1754944e-38, %v1139
        %v1141 = vsel %vm1138, %v1140, %v1136
        %v1142 = vmul.f32 1.0, %v1141
        %v1143 = vadd.f32 %v1096, %v671
        %v1145 = vrot.slane %v1143, 4
        %v1146 = vrot.slane %v1143, 5
        %1147 = vrot.lane.b32.xlu0 %v1145, 64
        %v1148 = vpop.permute.xlu0 %1147
        %1149 = vrot.lane.b32.xlu0 %v1146, 64
        %v1150 = vpop.permute.xlu0 %1149
        %v1153 = vmul.f32 %v1127, %v1148
        %v1154 = vmul.f32 %v1142, %v1150
        %1157 = vrot.lane.b32.xlu0 %v1153, 64
        %v1158 = vpop.permute.xlu0 %1157
        %1159 = vrot.lane.b32.xlu0 %v1154, 64
        %v1160 = vpop.permute.xlu0 %1159
        %v1163 = vadd.f32 %v589, %v1158
        %v1164 = vadd.f32 %v592, %v1160
        %v1165 = vtanh.pop %v1163
        %v1166 = vtanh.pop %v1164
        %v1167 = vsub.f32 1.0, %v1127
        %v1168 = vsub.f32 1.0, %v1142
        %1171 = vrot.lane.b32.xlu0 %v1165, 96
        %v1172 = vpop.permute.xlu0 %1171
        %1173 = vrot.lane.b32.xlu0 %v1166, 96
        %v1174 = vpop.permute.xlu0 %1173
        %v1177 = vmul.f32 %v1167, %v1172
        %v1178 = vmul.f32 %v1168, %v1174
        %v1179 = vrot.slane %v1067, 7
        %v1180 = vrot.slane %v1068, 7
        %v1183 = vmul.f32 %v1127, %v1179
        %v1184 = vmul.f32 %v1142, %v1180
        %v1185 = vadd.f32 %v1177, %v1183
        %v1186 = vadd.f32 %v1178, %v1184
        %v1189 = vrot.slane %v1185, 4
        %v1190 = vrot.slane %v1186, 3
        %v1191 = vsel %vm722, %v1190, %v1189
        %1192 = vrot.lane.b32.xlu0 %v1191, 96
        %v1193 = vpop.permute.xlu0 %1192
        %v1194 = vsel %vm602, %v1193, 0
        %1196 = vmatpush.msra.mxu0 0.0
        %1197 = vmatpush.msra.mxu0 0.0
        %1198 = vmatpush.msra.mxu0 0.0
        %1199 = vmatpush.msra.mxu0 0.0
        %1200 = vmatpush.msra.mxu0 0.0
        %1201 = vmatpush.msra.mxu0 0.0
        %1202 = vmatpush.msra.mxu0 0.0
        %1203 = vmatpush.msra.mxu0 0.0
        %1204 = vmatpush.msra.mxu0 0.0
        %1205 = vmatpush.msra.mxu0 0.0
        %1206 = vmatpush.msra.mxu0 0.0
        %1207 = vmatpush.msra.mxu0 0.0
        %1208 = vmatpush.msra.mxu0 %v597
        %1209 = vmatpush.msra.mxu0 %v596
        %1210 = vmatpush.msra.mxu0 %v595
        %1211 = vmatpush.msra.mxu0 %v594
        %1212 = vmatmul.f32.gmra.mxu0 %v1194
        %v1213 = vpop.f32.mrf.mxu0
        %v1214 = vadd.f32 0.0, %v1213
        %1215 = vdwg.mxu0
        %v1217 = vrot.slane %v1214, 3
        %v1218 = vrot.slane %v1214, 4
        %v1221 = vadd.f32 %v589, %v1217
        %v1222 = vadd.f32 %v592, %v1218
        %v1223 = vxor.u32 %v1221, 2147483648
        %v1224 = vxor.u32 %v1222, 2147483648
        %v1225 = vmul.f32 %v1223, 1.442695
        %v1226 = vpow.pop %v1225
        %v1227 = vmul.f32 %v1224, 1.442695
        %v1228 = vpow.pop %v1227
        %v1229 = vadd.f32 %v1226, 1.0
        %v1230 = vadd.f32 %v1228, 1.0
        %v1231 = vrcp.pop %v1229
        %v1232 = vmul.f32 %v1229, %v1231
        %v1233 = vsub.f32 1.0, %v1232
        %v1234 = vmul.f32 %v1231, %v1233
        %v1235 = vadd.f32 %v1231, %v1234
        %vm1236 = vweird.f32 %v1229
        %vm1237 = vweird.f32 %v1231
        %vm1238 = vmor %vm1236, %vm1237
        %v1239 = vsel %vm1238, %v1231, %v1235
        %v1240 = vand.u32 2147483647, %v1229
        %vm1241 = vcmp.eq.f32.partialorder %v1240, 8.507059e+37
        %v1242 = vand.u32 %v1229, 2147483648
        %v1243 = vor.u32 1.1754944e-38, %v1242
        %v1244 = vsel %vm1241, %v1243, %v1239
        %v1245 = vmul.f32 1.0, %v1244
        %v1246 = vrcp.pop %v1230
        %v1247 = vmul.f32 %v1230, %v1246
        %v1248 = vsub.f32 1.0, %v1247
        %v1249 = vmul.f32 %v1246, %v1248
        %v1250 = vadd.f32 %v1246, %v1249
        %vm1251 = vweird.f32 %v1230
        %vm1252 = vweird.f32 %v1246
        %vm1253 = vmor %vm1251, %vm1252
        %v1254 = vsel %vm1253, %v1246, %v1250
        %v1255 = vand.u32 2147483647, %v1230
        %vm1256 = vcmp.eq.f32.partialorder %v1255, 8.507059e+37
        %v1257 = vand.u32 %v1230, 2147483648
        %v1258 = vor.u32 1.1754944e-38, %v1257
        %v1259 = vsel %vm1256, %v1258, %v1254
        %v1260 = vmul.f32 1.0, %v1259
        %v1261 = vadd.f32 %v1214, %v671
        %v1263 = vrot.slane %v1261, 3
        %v1264 = vrot.slane %v1261, 4
        %1265 = vrot.lane.b32.xlu0 %v1263, 64
        %v1266 = vpop.permute.xlu0 %1265
        %1267 = vrot.lane.b32.xlu0 %v1264, 64
        %v1268 = vpop.permute.xlu0 %1267
        %v1271 = vmul.f32 %v1245, %v1266
        %v1272 = vmul.f32 %v1260, %v1268
        %1275 = vrot.lane.b32.xlu0 %v1271, 64
        %v1276 = vpop.permute.xlu0 %1275
        %1277 = vrot.lane.b32.xlu0 %v1272, 64
        %v1278 = vpop.permute.xlu0 %1277
        %v1281 = vadd.f32 %v589, %v1276
        %v1282 = vadd.f32 %v592, %v1278
        %v1283 = vtanh.pop %v1281
        %v1284 = vtanh.pop %v1282
        %v1285 = vsub.f32 1.0, %v1245
        %v1286 = vsub.f32 1.0, %v1260
        %1289 = vrot.lane.b32.xlu0 %v1283, 96
        %v1290 = vpop.permute.xlu0 %1289
        %1291 = vrot.lane.b32.xlu0 %v1284, 96
        %v1292 = vpop.permute.xlu0 %1291
        %v1295 = vmul.f32 %v1285, %v1290
        %v1296 = vmul.f32 %v1286, %v1292
        %v1297 = vrot.slane %v1185, 7
        %v1298 = vrot.slane %v1186, 7
        %v1301 = vmul.f32 %v1245, %v1297
        %v1302 = vmul.f32 %v1260, %v1298
        %v1303 = vadd.f32 %v1295, %v1301
        %v1304 = vadd.f32 %v1296, %v1302
        %v1307 = vrot.slane %v1303, 5
        %v1308 = vrot.slane %v1304, 4
        %v1309 = vsel %vm722, %v1308, %v1307
        %1310 = vrot.lane.b32.xlu0 %v1309, 96
        %v1311 = vpop.permute.xlu0 %1310
        %v1312 = vsel %vm602, %v1311, 0
        %1314 = vmatpush.msra.mxu0 0.0
        %1315 = vmatpush.msra.mxu0 0.0
        %1316 = vmatpush.msra.mxu0 0.0
        %1317 = vmatpush.msra.mxu0 0.0
        %1318 = vmatpush.msra.mxu0 0.0
        %1319 = vmatpush.msra.mxu0 0.0
        %1320 = vmatpush.msra.mxu0 0.0
        %1321 = vmatpush.msra.mxu0 0.0
        %1322 = vmatpush.msra.mxu0 0.0
        %1323 = vmatpush.msra.mxu0 0.0
        %1324 = vmatpush.msra.mxu0 0.0
        %1325 = vmatpush.msra.mxu0 0.0
        %1326 = vmatpush.msra.mxu0 %v597
        %1327 = vmatpush.msra.mxu0 %v596
        %1328 = vmatpush.msra.mxu0 %v595
        %1329 = vmatpush.msra.mxu0 %v594
        %1330 = vmatmul.f32.gmra.mxu0 %v1312
        %v1331 = vpop.f32.mrf.mxu0
        %v1332 = vadd.f32 0.0, %v1331
        %1333 = vdwg.mxu0
        %v1335 = vrot.slane %v1332, 2
        %v1336 = vrot.slane %v1332, 3
        %v1339 = vadd.f32 %v589, %v1335
        %v1340 = vadd.f32 %v592, %v1336
        %v1341 = vxor.u32 %v1339, 2147483648
        %v1342 = vxor.u32 %v1340, 2147483648
        %v1343 = vmul.f32 %v1341, 1.442695
        %v1344 = vpow.pop %v1343
        %v1345 = vmul.f32 %v1342, 1.442695
        %v1346 = vpow.pop %v1345
        %v1347 = vadd.f32 %v1344, 1.0
        %v1348 = vadd.f32 %v1346, 1.0
        %v1349 = vrcp.pop %v1347
        %v1350 = vmul.f32 %v1347, %v1349
        %v1351 = vsub.f32 1.0, %v1350
        %v1352 = vmul.f32 %v1349, %v1351
        %v1353 = vadd.f32 %v1349, %v1352
        %vm1354 = vweird.f32 %v1347
        %vm1355 = vweird.f32 %v1349
        %vm1356 = vmor %vm1354, %vm1355
        %v1357 = vsel %vm1356, %v1349, %v1353
        %v1358 = vand.u32 2147483647, %v1347
        %vm1359 = vcmp.eq.f32.partialorder %v1358, 8.507059e+37
        %v1360 = vand.u32 %v1347, 2147483648
        %v1361 = vor.u32 1.1754944e-38, %v1360
        %v1362 = vsel %vm1359, %v1361, %v1357
        %v1363 = vmul.f32 1.0, %v1362
        %v1364 = vrcp.pop %v1348
        %v1365 = vmul.f32 %v1348, %v1364
        %v1366 = vsub.f32 1.0, %v1365
        %v1367 = vmul.f32 %v1364, %v1366
        %v1368 = vadd.f32 %v1364, %v1367
        %vm1369 = vweird.f32 %v1348
        %vm1370 = vweird.f32 %v1364
        %vm1371 = vmor %vm1369, %vm1370
        %v1372 = vsel %vm1371, %v1364, %v1368
        %v1373 = vand.u32 2147483647, %v1348
        %vm1374 = vcmp.eq.f32.partialorder %v1373, 8.507059e+37
        %v1375 = vand.u32 %v1348, 2147483648
        %v1376 = vor.u32 1.1754944e-38, %v1375
        %v1377 = vsel %vm1374, %v1376, %v1372
        %v1378 = vmul.f32 1.0, %v1377
        %v1379 = vadd.f32 %v1332, %v671
        %v1381 = vrot.slane %v1379, 2
        %v1382 = vrot.slane %v1379, 3
        %1383 = vrot.lane.b32.xlu0 %v1381, 64
        %v1384 = vpop.permute.xlu0 %1383
        %1385 = vrot.lane.b32.xlu0 %v1382, 64
        %v1386 = vpop.permute.xlu0 %1385
        %v1389 = vmul.f32 %v1363, %v1384
        %v1390 = vmul.f32 %v1378, %v1386
        %1393 = vrot.lane.b32.xlu0 %v1389, 64
        %v1394 = vpop.permute.xlu0 %1393
        %1395 = vrot.lane.b32.xlu0 %v1390, 64
        %v1396 = vpop.permute.xlu0 %1395
        %v1399 = vadd.f32 %v589, %v1394
        %v1400 = vadd.f32 %v592, %v1396
        %v1401 = vtanh.pop %v1399
        %v1402 = vtanh.pop %v1400
        %v1403 = vsub.f32 1.0, %v1363
        %v1404 = vsub.f32 1.0, %v1378
        %1407 = vrot.lane.b32.xlu0 %v1401, 96
        %v1408 = vpop.permute.xlu0 %1407
        %1409 = vrot.lane.b32.xlu0 %v1402, 96
        %v1410 = vpop.permute.xlu0 %1409
        %v1413 = vmul.f32 %v1403, %v1408
        %v1414 = vmul.f32 %v1404, %v1410
        %v1415 = vrot.slane %v1303, 7
        %v1416 = vrot.slane %v1304, 7
        %v1419 = vmul.f32 %v1363, %v1415
        %v1420 = vmul.f32 %v1378, %v1416
        %v1421 = vadd.f32 %v1413, %v1419
        %v1422 = vadd.f32 %v1414, %v1420
        %v1425 = vrot.slane %v1421, 6
        %v1426 = vrot.slane %v1422, 5
        %v1427 = vsel %vm722, %v1426, %v1425
        %1428 = vrot.lane.b32.xlu0 %v1427, 96
        %v1429 = vpop.permute.xlu0 %1428
        %v1430 = vsel %vm602, %v1429, 0
        %1432 = vmatpush.msra.mxu0 0.0
        %1433 = vmatpush.msra.mxu0 0.0
        %1434 = vmatpush.msra.mxu0 0.0
        %1435 = vmatpush.msra.mxu0 0.0
        %1436 = vmatpush.msra.mxu0 0.0
        %1437 = vmatpush.msra.mxu0 0.0
        %1438 = vmatpush.msra.mxu0 0.0
        %1439 = vmatpush.msra.mxu0 0.0
        %1440 = vmatpush.msra.mxu0 0.0
        %1441 = vmatpush.msra.mxu0 0.0
        %1442 = vmatpush.msra.mxu0 0.0
        %1443 = vmatpush.msra.mxu0 0.0
        %1444 = vmatpush.msra.mxu0 %v597
        %1445 = vmatpush.msra.mxu0 %v596
        %1446 = vmatpush.msra.mxu0 %v595
        %1447 = vmatpush.msra.mxu0 %v594
        %1448 = vmatmul.f32.gmra.mxu0 %v1430
        %v1449 = vpop.f32.mrf.mxu0
        %v1450 = vadd.f32 0.0, %v1449
        %1451 = vdwg.mxu0
        %v1453 = vrot.slane %v1450, 1
        %v1454 = vrot.slane %v1450, 2
        %v1457 = vadd.f32 %v589, %v1453
        %v1458 = vadd.f32 %v592, %v1454
        %v1459 = vxor.u32 %v1457, 2147483648
        %v1460 = vxor.u32 %v1458, 2147483648
        %v1461 = vmul.f32 %v1459, 1.442695
        %v1462 = vpow.pop %v1461
        %v1463 = vmul.f32 %v1460, 1.442695
        %v1464 = vpow.pop %v1463
        %v1465 = vadd.f32 %v1462, 1.0
        %v1466 = vadd.f32 %v1464, 1.0
        %v1467 = vrcp.pop %v1465
        %v1468 = vmul.f32 %v1465, %v1467
        %v1469 = vsub.f32 1.0, %v1468
        %v1470 = vmul.f32 %v1467, %v1469
        %v1471 = vadd.f32 %v1467, %v1470
        %vm1472 = vweird.f32 %v1465
        %vm1473 = vweird.f32 %v1467
        %vm1474 = vmor %vm1472, %vm1473
        %v1475 = vsel %vm1474, %v1467, %v1471
        %v1476 = vand.u32 2147483647, %v1465
        %vm1477 = vcmp.eq.f32.partialorder %v1476, 8.507059e+37
        %v1478 = vand.u32 %v1465, 2147483648
        %v1479 = vor.u32 1.1754944e-38, %v1478
        %v1480 = vsel %vm1477, %v1479, %v1475
        %v1481 = vmul.f32 1.0, %v1480
        %v1482 = vrcp.pop %v1466
        %v1483 = vmul.f32 %v1466, %v1482
        %v1484 = vsub.f32 1.0, %v1483
        %v1485 = vmul.f32 %v1482, %v1484
        %v1486 = vadd.f32 %v1482, %v1485
        %vm1487 = vweird.f32 %v1466
        %vm1488 = vweird.f32 %v1482
        %vm1489 = vmor %vm1487, %vm1488
        %v1490 = vsel %vm1489, %v1482, %v1486
        %v1491 = vand.u32 2147483647, %v1466
        %vm1492 = vcmp.eq.f32.partialorder %v1491, 8.507059e+37
        %v1493 = vand.u32 %v1466, 2147483648
        %v1494 = vor.u32 1.1754944e-38, %v1493
        %v1495 = vsel %vm1492, %v1494, %v1490
        %v1496 = vmul.f32 1.0, %v1495
        %v1497 = vadd.f32 %v1450, %v671
        %v1499 = vrot.slane %v1497, 1
        %v1500 = vrot.slane %v1497, 2
        %1501 = vrot.lane.b32.xlu0 %v1499, 64
        %v1502 = vpop.permute.xlu0 %1501
        %1503 = vrot.lane.b32.xlu0 %v1500, 64
        %v1504 = vpop.permute.xlu0 %1503
        %v1507 = vmul.f32 %v1481, %v1502
        %v1508 = vmul.f32 %v1496, %v1504
        %1511 = vrot.lane.b32.xlu0 %v1507, 64
        %v1512 = vpop.permute.xlu0 %1511
        %1513 = vrot.lane.b32.xlu0 %v1508, 64
        %v1514 = vpop.permute.xlu0 %1513
        %v1517 = vadd.f32 %v589, %v1512
        %v1518 = vadd.f32 %v592, %v1514
        %v1519 = vtanh.pop %v1517
        %v1520 = vtanh.pop %v1518
        %v1521 = vsub.f32 1.0, %v1481
        %v1522 = vsub.f32 1.0, %v1496
        %1525 = vrot.lane.b32.xlu0 %v1519, 96
        %v1526 = vpop.permute.xlu0 %1525
        %1527 = vrot.lane.b32.xlu0 %v1520, 96
        %v1528 = vpop.permute.xlu0 %1527
        %v1531 = vmul.f32 %v1521, %v1526
        %v1532 = vmul.f32 %v1522, %v1528
        %v1533 = vrot.slane %v1421, 7
        %v1534 = vrot.slane %v1422, 7
        %v1537 = vmul.f32 %v1481, %v1533
        %v1538 = vmul.f32 %v1496, %v1534
        %v1539 = vadd.f32 %v1531, %v1537
        %v1540 = vadd.f32 %v1532, %v1538
        %v1543 = vrot.slane %v1540, 7
        %1544 = vrot.lane.b32.xlu0 %v1539, 96
        %v1545 = vpop.permute.xlu0 %1544
        %1546 = vrot.lane.b32.xlu0 %v1543, 96
        %v1547 = vpop.permute.xlu0 %1546
        %vm1550 = vcmask 261127
        %1551 = vst.msk [vmem:[#allocation11 - $0x7] sm:$0x80] %vm1550, %v1545
        %vm1552 = vcmask 253952
        %1553 = vst.msk [vmem:[#allocation11 + $0x1] sm:$0x1] %vm1552, %v1547
        %vm1554 = vcmask 1040384
        %v1555 = vsel %vm1554, %v717, %v832
        %v1556 = vsel %vm1554, %v718, %v833
        %vm1557 = vcmask 1041408
        %v1558 = vsel %vm1557, %v1555, %v949
        %v1559 = vsel %vm1557, %v1556, %v950
        %vm1560 = vcmask 1042432
        %v1561 = vsel %vm1560, %v1558, %v1067
        %v1562 = vsel %vm1560, %v1559, %v1068
        %vm1563 = vcmask 1043456
        %v1564 = vsel %vm1563, %v1561, %v1185
        %v1565 = vsel %vm1563, %v1562, %v1186
        %vm1566 = vcmask 1044480
        %v1567 = vsel %vm1566, %v1564, %v1303
        %v1568 = vsel %vm1566, %v1565, %v1304
        %vm1569 = vcmask 1045504
        %v1570 = vsel %vm1569, %v1567, %v1421
        %v1571 = vsel %vm1569, %v1568, %v1422
        %vm1572 = vcmask 1046528
        %v1573 = vsel %vm1572, %v1570, %v1539
        %v1574 = vsel %vm1572, %v1571, %v1540
        %v1575 = vld [vmem:[#allocation8] sm:$0xff]
        %v1576 = vld [vmem:[#allocation8 + $0x8] sm:$0xff]
        %v1577 = vld [vmem:[#allocation8 + $0x10] sm:$0xff]
        %v1578 = vld [vmem:[#allocation8 + $0x18] sm:$0xff]
        %v1579 = vld [vmem:[%s9] sm:$0x1]
        %v1581 = vperm.slane %v1579, 0
        %1585 = vrot.lane.b32.xlu0 %v1573, 96
        %v1586 = vpop.permute.xlu0 %1585
        %1587 = vrot.lane.b32.xlu0 %v1574, 96
        %v1588 = vpop.permute.xlu0 %1587
        %v1589 = vsel %vm602, %v1586, 0
        %v1591 = vsel %vm602, %v1588, 0
        %1593 = vmatpush.msra.mxu0 0.0
        %1594 = vmatpush.msra.mxu0 0.0
        %1595 = vmatpush.msra.mxu0 0.0
        %1596 = vmatpush.msra.mxu0 0.0
        %1597 = vmatpush.msra.mxu0 0.0
        %1598 = vmatpush.msra.mxu0 0.0
        %1599 = vmatpush.msra.mxu0 0.0
        %1600 = vmatpush.msra.mxu0 0.0
        %1601 = vmatpush.msra.mxu0 0.0
        %1602 = vmatpush.msra.mxu0 0.0
        %1603 = vmatpush.msra.mxu0 0.0
        %1604 = vmatpush.msra.mxu0 0.0
        %1605 = vmatpush.msra.mxu0 %v1578
        %1606 = vmatpush.msra.mxu0 %v1577
        %1607 = vmatpush.msra.mxu0 %v1576
        %1608 = vmatpush.msra.mxu0 %v1575
        %1609 = vmatmul.f32.gmra.mxu0 %v1589
        %v1610 = vpop.f32.mrf.mxu0
        %v1611 = vadd.f32 %v1581, %v1610
        %1612 = vmatmul.f32.gmra.mxu0 %v1591
        %v1613 = vpop.f32.mrf.mxu0
        %v1614 = vadd.f32 %v1581, %v1613
        %1615 = vdwg.mxu0
        %v1616 = vmax.f32 %v1611, 0.0
        %v1617 = vmax.f32 %v1614, 0.0
        %v1618 = vld [vmem:[%s10] sm:$0xff]
        %v1619 = vld [vmem:[%s10 + $0x8] sm:$0xff]
        %v1620 = vld [vmem:[%s10 + $0x10] sm:$0xff]
        %v1621 = vld [vmem:[%s10 + $0x18] sm:$0xff]
        %v1622 = vld [vmem:[%s10 + $0x20] sm:$0xff]
        %v1623 = vld [vmem:[%s10 + $0x28] sm:$0xff]
        %v1624 = vld [vmem:[%s10 + $0x30] sm:$0xff]
        %v1625 = vld [vmem:[%s10 + $0x38] sm:$0xff]
        %v1626 = vld [vmem:[%s11] sm:$0x1]
        %v1628 = vperm.slane %v1626, 0
        %v1631 = vsel %vm564, %v1616, 0
        %v1634 = vsel %vm564, %v1617, 0
        %1636 = vmatpush.msra.mxu0 0.0
        %1637 = vmatpush.msra.mxu0 0.0
        %1638 = vmatpush.msra.mxu0 0.0
        %1639 = vmatpush.msra.mxu0 0.0
        %1640 = vmatpush.msra.mxu0 0.0
        %1641 = vmatpush.msra.mxu0 0.0
        %1642 = vmatpush.msra.mxu0 0.0
        %1643 = vmatpush.msra.mxu0 0.0
        %1644 = vmatpush.msra.mxu0 %v1625
        %1645 = vmatpush.msra.mxu0 %v1624
        %1646 = vmatpush.msra.mxu0 %v1623
        %1647 = vmatpush.msra.mxu0 %v1622
        %1648 = vmatpush.msra.mxu0 %v1621
        %1649 = vmatpush.msra.mxu0 %v1620
        %1650 = vmatpush.msra.mxu0 %v1619
        %1651 = vmatpush.msra.mxu0 %v1618
        %1652 = vmatmul.f32.gmra.mxu0 %v1631
        %v1653 = vpop.f32.mrf.mxu0
        %v1654 = vadd.f32 %v1628, %v1653
        %1655 = vmatmul.f32.gmra.mxu0 %v1634
        %v1656 = vpop.f32.mrf.mxu0
        %v1657 = vadd.f32 %v1628, %v1656
        %1658 = vdwg.mxu0
        %vm1659 = vcmask 48128
        %v1660 = vsel %vm1659, %v1654, 0.0
        %1661 = vadd.xlane.f32.xlu0 %v1660
        %v1662 = vpop.xlane.xlu0 %1661
        %v1663 = vsel %vm1659, %v1657, 0.0
        %1664 = vadd.xlane.f32.xlu0 %v1663
        %v1665 = vpop.xlane.xlu0 %1664
        %v1666 = vrcp.pop 6.0
        %v1667 = vmul.f32 6.0, %v1666
        %v1668 = vsub.f32 1.0, %v1667
        %v1669 = vmul.f32 %v1666, %v1668
        %v1670 = vadd.f32 %v1666, %v1669
        %vm1671 = vweird.f32 %v1666
        %v1672 = vsel %vm1671, %v1666, %v1670
        %v1673 = vmul.f32 %v1662, %v1672
        %v1674 = vmul.f32 %v1665, %v1672
        %v1675 = vsub.f32 %v1654, %v1673
        %v1676 = vsub.f32 %v1657, %v1674
        %1678 = vset.pattern.permute.xlu0 6
        %1679 = vperm.xlu0 %1678, %v1654
        %v1680 = vpop.permute.xlu0 %1679
        %1683 = vset.pattern.permute.xlu0 6
        %1684 = vperm.xlu0 %1683, %v1657
        %v1685 = vpop.permute.xlu0 %1684
        %v1687 = vadd.f32 %v1680, %v1675
        %v1688 = vadd.f32 %v1685, %v1676
        %1689 = vst.msk [vmem:[%s502] sm:$0xff] %vm1659, %v1687
        %1690 = vst.msk [vmem:[%s502 + $0x8] sm:$0xff] %vm1659, %v1688
        %s1691 = sand.u32 %s296, 1
        %s1692 = sand.u32 %s296, 1
        %s1693 = smul.addr %s1692, 16
        %s1694 = scalar_lea.vmem [#allocation10], %s1693
        // Predicated region
        $region89: #{tpu_custom_call.1} parent=67 // pred_check
          %p1695 = pneg %p306
        $region90: #{tpu_custom_call.1} parent=67 // pred_check_branch
          %1697 = sbr.rel (%p1695) target = $region92
        $region91: #{tpu_custom_call.1} parent=67 // pred_region
          %s1698 = smul.addr %s31, 8
          %s1699 = scalar_lea.vmem %s12, %s1698
          // Predicated region
          $region93: #{tpu_custom_call.1} parent=91 // pred_check
            _
          $region94: #{tpu_custom_call.1} parent=91 // pred_check_branch
            %1701 = sbr.rel (0) target = $region96
          $region95: #{tpu_custom_call.1} parent=91 // pred_region
            // Predicated region
            $region97: #{tpu_custom_call.1} parent=95 // pred_check
              _
            $region98: #{tpu_custom_call.1} parent=95 // pred_check_branch
              %1703 = sbr.rel (0) target = $region100
            $region99: #{tpu_custom_call.1} parent=95 // pred_region
              // Predicated region
              $region112: #{tpu_custom_call.1} parent=99 // pred_check
                _
              $region113: #{tpu_custom_call.1} parent=99 // pred_check_branch
                %1721 = sbr.rel (0) target = $region115
              $region114: #{tpu_custom_call.1} parent=99 // pred_region
                loop: start=0, step=1, limit=1
                $region116: #{tpu_custom_call.1} parent=114 // loop_pre_header
                  _
                $region117: #{tpu_custom_call.1} parent=114 // loop_header
                  %s1723 = sphi 0, %s1727
                  %p1724 = scmp.ge.s32.totalorder %s1723, 1
                  %s1728 = sphi %s1694, %s1694
                  %s1729 = sphi %s1699, %s1699
                $region118: #{tpu_custom_call.1} parent=114 // loop_header_branch
                  %1726 = sbr.rel (%p1724) target = $region122
                $region119: #{tpu_custom_call.1} parent=114 // loop_body
                  %v1730 = vld [vmem:[%s1728] sm:$0xff]
                  %1731 = vst [vmem:[%s1729] sm:$0xff] %v1730
                  %v1732 = vld [vmem:[%s1728 + $0x8] sm:$0xff]
                  %1733 = vst [vmem:[%s1729 + $0x10] sm:$0xff] %v1732
                $region120: #{tpu_custom_call.1} parent=114 // loop_footer
                  %s1727 = sadd.s32 1, %s1723
                $region121: #{tpu_custom_call.1} parent=114 // loop_footer_branch
                  %1722 = sbr.rel target = $region117
                $region122: #{tpu_custom_call.1} parent=114 // loop_exit
                  _
              $region115: #{tpu_custom_call.1} parent=99 // pred_fallthru
                _
              // Predicated region
              $region123: #{tpu_custom_call.1} parent=99 // pred_check
                _
              $region124: #{tpu_custom_call.1} parent=99 // pred_check_branch
                %1735 = sbr.rel target = $region126
              $region125: #{tpu_custom_call.1} parent=99 // pred_region
                _
              $region126: #{tpu_custom_call.1} parent=99 // pred_fallthru
                _
            $region100: #{tpu_custom_call.1} parent=95 // pred_fallthru
              _
            // Predicated region
            $region101: #{tpu_custom_call.1} parent=95 // pred_check
              _
            $region102: #{tpu_custom_call.1} parent=95 // pred_check_branch
              %1705 = sbr.rel target = $region104
            $region103: #{tpu_custom_call.1} parent=95 // pred_region
              %s1707 = ssub.s32 256, 1
              loop: start=0, step=1, limit=1
              $region105: #{tpu_custom_call.1} parent=103 // loop_pre_header
                _
              $region106: #{tpu_custom_call.1} parent=103 // loop_header
                %s1709 = sphi 0, %s1713
                %p1710 = scmp.ge.s32.totalorder %s1709, 1
                %s1714 = sphi %s1694, %s1694
                %s1715 = sphi %s1699, %s1699
              $region107: #{tpu_custom_call.1} parent=103 // loop_header_branch
                %1712 = sbr.rel (%p1710) target = $region111
              $region108: #{tpu_custom_call.1} parent=103 // loop_body
                %v1716 = vld [vmem:[%s1714] sm:%s1707]
                %1717 = vst [vmem:[%s1715] sm:%s1707] %v1716
                %v1718 = vld [vmem:[%s1714 + $0x8] sm:%s1707]
                %1719 = vst [vmem:[%s1715 + $0x10] sm:%s1707] %v1718
              $region109: #{tpu_custom_call.1} parent=103 // loop_footer
                %s1713 = sadd.s32 1, %s1709
              $region110: #{tpu_custom_call.1} parent=103 // loop_footer_branch
                %1708 = sbr.rel target = $region106
              $region111: #{tpu_custom_call.1} parent=103 // loop_exit
                _
            $region104: #{tpu_custom_call.1} parent=95 // pred_fallthru
              _
          $region96: #{tpu_custom_call.1} parent=91 // pred_fallthru
            _
          %1736 = vnop
        $region92: #{tpu_custom_call.1} parent=67 // pred_fallthru
          _
        // Predicated region
        $region127: #{tpu_custom_call.1} parent=67 // pred_check
          %p1737 = pneg %p327
        $region128: #{tpu_custom_call.1} parent=67 // pred_check_branch
          %1739 = sbr.rel (%p1737) target = $region130
        $region129: #{tpu_custom_call.1} parent=67 // pred_region
          %1741 = vsyncadd [#allocation4], 0
          %s1743 = sshll.u32 [#allocation11], 4
          %s1744 = int_to_ptr.vmem [resolvable:$true] %s1743
          %s1745 = sshll.u32 %s13, 4
          %s1746 = int_to_ptr.hbm [resolvable:$true] %s1745
          %1748 = dma.vmem_to_hbm [thread:$0]  %s1744, 32, %s1746, [#allocation4]
        $region130: #{tpu_custom_call.1} parent=67 // pred_fallthru
          _
        // Predicated region
        $region131: #{tpu_custom_call.1} parent=67 // pred_check
          %p1749 = pneg %p327
        $region132: #{tpu_custom_call.1} parent=67 // pred_check_branch
          %1751 = sbr.rel (%p1749) target = $region134
        $region133: #{tpu_custom_call.1} parent=67 // pred_region
          %1753 = dma.done [#allocation4], 32
        $region134: #{tpu_custom_call.1} parent=67 // pred_fallthru
          _
      $region68: #{tpu_custom_call.1} parent=5 // pred_fallthru
        _
      %p1754 = scmp.le.s32.totalorder 2, %s26
      // Predicated region
      $region135: #{tpu_custom_call.1} parent=5 // pred_check
        %p1755 = pneg %p1754
      $region136: #{tpu_custom_call.1} parent=5 // pred_check_branch
        %1757 = sbr.rel (%p1755) target = $region138
      $region137: #{tpu_custom_call.1} parent=5 // pred_region
        %s1758 = ssub.s32 %s26, 2
        // Predicated region
        $region139: #{tpu_custom_call.1} parent=137 // pred_check
          %p1759 = pneg %p312
        $region140: #{tpu_custom_call.1} parent=137 // pred_check_branch
          %1761 = sbr.rel (%p1759) target = $region142
        $region141: #{tpu_custom_call.1} parent=137 // pred_region
          %s1762 = sand.u32 %s297, 1
          %s1763 = sand.u32 %s297, 1
          %s1764 = smul.addr %s1763, 16
          %s1765 = scalar_lea.vmem [#allocation10], %s1764
        $region142: #{tpu_custom_call.1} parent=137 // pred_fallthru
          _
      $region138: #{tpu_custom_call.1} parent=5 // pred_fallthru
        _
    $region6: #{tpu_custom_call.1} parent=1 // loop_footer
      %s30 = sadd.s32 1, %s26
    $region7: #{tpu_custom_call.1} parent=1 // loop_footer_branch
      %25 = sbr.rel target = $region3
    $region8: #{tpu_custom_call.1} parent=1 // loop_exit
      _
    %1766 = vsyncpa [#allocation3], 1
    %s1767 = scalar_lea.sflag [#allocation3], 1
    %1768 = vsyncpa %s1767, 1
    %1769 = vsyncpa [#allocation6], 1
    %1770 = vsyncpa [#allocation9], 1
    %1771 = vsyncpa [#allocation4], 1
    %s1772 = scalar_lea.sflag [#allocation4], 1
    %1773 = vsyncpa %s1772, 1

</llo_original>
